<compile_context>
chip_gen: v7x
topology: tpu7x:2x2x1
jax: 0.10.0
libtpu: 0.0.40
codegen_flags: <defaults>
</compile_context>

<pallas_src>
import jax
import jax.numpy as jnp
from jax import lax
from jax.experimental import pallas as pl
from jax.experimental.pallas import tpu as pltpu

TIME_STEP = 1
INPUT_SIZE = int(28 / TIME_STEP)   # 28
INPUT_PAD = 32                     # zero-padded contraction dim for the MXU
HIDDEN = 32
NUM_LAYERS = 2


def _lstm_kernel(x_ref, wih0_ref, b0_ref, wpack_ref, b1_ref, h_out_ref):
    """Whole sequence, both layers, one invocation.

    x_ref    : (T*B, Ip)  bf16  time-major, zero-padded input (row t*B+b = x[b, t])
    wih0_ref : (Ip, 4H)   bf16  layer-0 input weights (pre-transposed, padded)
    b0_ref   : (1, 4H)    f32   layer-0 combined bias (b_ih + b_hh)
    wpack_ref: (2H, 8H)   bf16  [[W_hh0.T, W_ih1.T], [0, W_hh1.T]]
    b1_ref   : (1, 4H)    f32   layer-1 combined bias
    h_out_ref: (B, H)     f32   top-layer h at the last time step
    """
    B, H = h_out_ref.shape
    T = x_ref.shape[0] // B
    G = 4 * H

    # ---- loop-invariant loads / broadcasts (hoisted; JAX won't CSE these) --
    w_pack = wpack_ref[...]                                    # (2H, 8H) bf16
    b1_b = jnp.broadcast_to(b1_ref[...], (B, G))               # (B, 4H) f32

    # ---- layer-0 input projection for ALL T steps: one MXU matmul ----------
    # Time-major result: rows [t*B:(t+1)*B] are step t's (8, 128) slab.
    gx0 = jnp.dot(x_ref[...], wih0_ref[...],
                  preferred_element_type=jnp.float32) + b0_ref[...]   # (T*B, 4H)

    # Lane mask selecting the g-gate columns (PyTorch gate order: i, f, g, o).
    lane = lax.broadcasted_iota(jnp.int32, (B, G), 1)
    g_mask = (lane >= 2 * H) & (lane < 3 * H)

    def cell(gates, c):
        # Full-vreg activations: one sigmoid + one tanh over the whole
        # (B, 128) gates vreg (g lanes picked by mask) + tanh(c_new)
        # -> 3 EUP passes per cell (vs 5 with per-gate quarter-width slices).
        act = jnp.where(g_mask, jnp.tanh(gates), jax.nn.sigmoid(gates))
        i_a = act[:, 0 * H:1 * H]
        f_a = act[:, 1 * H:2 * H]
        g_a = act[:, 2 * H:3 * H]
        o_a = act[:, 3 * H:4 * H]
        c_new = f_a * c + i_a * g_a
        h_new = o_a * jnp.tanh(c_new)
        return h_new, c_new

    zeros = jnp.zeros((B, H), jnp.float32)
    c0 = zeros
    h1 = zeros
    c1 = zeros

    # ---- stage 0: both recurrent states are zero -> no GEMM needed ---------
    h0, c0 = cell(gx0[0:B, :], c0)

    # ---- pipelined stages: ONE fused GEMM per stage -------------------------
    # Stage s multiplies [h0(s-1), h1(s-2)] by the packed (2H, 8H) weight:
    #   cols [:4H] = h0(s-1) @ W_hh0                      -> layer-0 gates, step s
    #   cols [4H:] = h0(s-1) @ W_ih1 + h1(s-2) @ W_hh1    -> layer-1 gates, step s-1
    # T is a compile-time constant; the loop is fully unrolled with static
    # slices so the two cells' EUP/VPU work can overlap across stages.
    for s in range(1, T + 1):
        lhs = jnp.concatenate([h0, h1], axis=1).astype(jnp.bfloat16)    # (B, 2H)
        gg = jnp.dot(lhs, w_pack, preferred_element_type=jnp.float32)   # (B, 8H)
        # layer 1, step s-1
        h1, c1 = cell(gg[:, G:] + b1_b, c1)
        # layer 0, step s (the drain stage s == T has no step-T input)
        if s < T:
            h0, c0 = cell(gx0[s * B:(s + 1) * B, :] + gg[:, :G], c0)

    h_out_ref[...] = h1


@jax.jit
def rnn_forward(x, kparams):
    """x: (B, T, INPUT_SIZE) f32 -> (B, 1) f32 (matches RNN.forward)."""
    wih0, b0, w_pack, b1, wout, bout = kparams
    B, T, I = x.shape
    H = HIDDEN
    i_pad = wih0.shape[0]

    # Time-major, flattened, zero-padded bf16 MXU operand (free-ish in HBM/XLA).
    xt = jnp.transpose(x, (1, 0, 2)).reshape(T * B, I)
    xt = jnp.pad(xt, ((0, 0), (0, i_pad - I))).astype(jnp.bfloat16)

    h_last = pl.pallas_call(
        _lstm_kernel,
        out_shape=jax.ShapeDtypeStruct((B, H), jnp.float32),
        in_specs=[pl.BlockSpec(memory_space=pltpu.MemorySpace.VMEM)
                  for _ in range(5)],
        out_specs=pl.BlockSpec(memory_space=pltpu.MemorySpace.VMEM),
    )(xt, wih0, b0, w_pack, b1)

    # Linear(32, 1) on the last hidden state: one trivial XLA op; keeps the
    # kernel's store a lane-dense (B, H) slab instead of a 1-lane write.
    return h_last @ wout + bout


def init_params(key):
    """Deterministic init with PyTorch LSTM/Linear parameter shapes (f32)."""
    H, I = HIDDEN, INPUT_SIZE
    k = 1.0 / jnp.sqrt(jnp.float32(H))
    keys = jax.random.split(key, 10)

    def u(kk, shape):
        return jax.random.uniform(kk, shape, jnp.float32, -k, k)

    return dict(
        w_ih0=u(keys[0], (4 * H, I)),
        w_hh0=u(keys[1], (4 * H, H)),
        b_ih0=u(keys[2], (4 * H,)),
        b_hh0=u(keys[3], (4 * H,)),
        w_ih1=u(keys[4], (4 * H, H)),
        w_hh1=u(keys[5], (4 * H, H)),
        b_ih1=u(keys[6], (4 * H,)),
        b_hh1=u(keys[7], (4 * H,)),
        w_out=jax.random.uniform(keys[8], (1, H), jnp.float32, -k, k),
        b_out=jax.random.uniform(keys[9], (1,), jnp.float32, -k, k),
    )


def pack_params(p, i_pad=INPUT_PAD):
    """Repack PyTorch-layout params for the kernel:
      - W_ih0.T zero-padded 28 -> 32 on the contraction dim, cast to bf16
      - pipelined weight [[W_hh0.T, W_ih1.T], [0, W_hh1.T]] (2H, 8H), bf16
      - per-layer biases folded (b_ih + b_hh), kept f32 (added post-accumulation)
      - output Linear kept f32 (applied in the wrapper)
    """
    H, I = HIDDEN, INPUT_SIZE
    wih0 = jnp.zeros((i_pad, 4 * H), jnp.float32).at[:I].set(p["w_ih0"].T)
    w_top = jnp.concatenate([p["w_hh0"].T, p["w_ih1"].T], axis=1)      # (H, 8H)
    w_bot = jnp.concatenate([jnp.zeros((H, 4 * H), jnp.float32),
                             p["w_hh1"].T], axis=1)                     # (H, 8H)
    w_pack = jnp.concatenate([w_top, w_bot], axis=0)                    # (2H, 8H)
    return (
        wih0.astype(jnp.bfloat16),                       # (Ip, 4H)
        (p["b_ih0"] + p["b_hh0"]).reshape(1, 4 * H),     # (1, 4H) f32
        w_pack.astype(jnp.bfloat16),                     # (2H, 8H)
        (p["b_ih1"] + p["b_hh1"]).reshape(1, 4 * H),     # (1, 4H) f32
        p["w_out"].T,                                    # (H, 1)  f32
        p["b_out"].reshape(1, 1),                        # (1, 1)  f32
    )


def _mm_bf16(a, b):
    """bf16-operand, f32-accumulate matmul (what the kernel's MXU does)."""
    return jnp.dot(a.astype(jnp.bfloat16), b.astype(jnp.bfloat16),
                   preferred_element_type=jnp.float32)


def _mm_f32(a, b):
    return jnp.dot(a, b, preferred_element_type=jnp.float32)


def rnn_reference(x, p, matmul=_mm_bf16):
    """Pure-JAX (lax.scan) reference for the PyTorch module's forward."""
    H = HIDDEN
    B, T, I = x.shape
    xt = jnp.transpose(x, (1, 0, 2))  # (T, B, I)
    wih0, whh0 = p["w_ih0"].T, p["w_hh0"].T
    wih1, whh1 = p["w_ih1"].T, p["w_hh1"].T
    b0 = (p["b_ih0"] + p["b_hh0"]).reshape(1, 4 * H)
    b1 = (p["b_ih1"] + p["b_hh1"]).reshape(1, 4 * H)

    def cell(gates, c):
        i_g = jax.nn.sigmoid(gates[:, 0 * H:1 * H])
        f_g = jax.nn.sigmoid(gates[:, 1 * H:2 * H])
        g_g = jnp.tanh(gates[:, 2 * H:3 * H])
        o_g = jax.nn.sigmoid(gates[:, 3 * H:4 * H])
        c_new = f_g * c + i_g * g_g
        return o_g * jnp.tanh(c_new), c_new

    def step(carry, x_t):
        h0, c0, h1, c1 = carry
        h0, c0 = cell(matmul(x_t, wih0) + matmul(h0, whh0) + b0, c0)
        h1, c1 = cell(matmul(h0, wih1) + matmul(h1, whh1) + b1, c1)
        return (h0, c0, h1, c1), None

    init = tuple(jnp.zeros((B, H), jnp.float32) for _ in range(4))
    (h0, c0, h1, c1), _ = lax.scan(step, init, xt)
    return h1 @ p["w_out"].T + p["b_out"].reshape(1, 1)


if __name__ == "__main__":
    key = jax.random.PRNGKey(0)
    pkey, xkey = jax.random.split(key)

    params = init_params(pkey)
    kparams = pack_params(params)

    B, T = 8, 8   # B multiple of 8 -> full f32 sublane occupancy
    x = jax.random.normal(xkey, (B, T, INPUT_SIZE), jnp.float32)

    out = rnn_forward(x, kparams)
    out = jax.block_until_ready(out)
    assert out.shape == (B, 1), out.shape

    # Tight check vs a reference applying the same bf16 MXU-operand rounding.
    ref_mixed = rnn_reference(x, params, matmul=_mm_bf16)
    assert jnp.allclose(out, ref_mixed, atol=1e-3, rtol=1e-3), (out, ref_mixed)

    # Coarse sanity check vs strict-f32 module math (bf16 drift is ~1e-2 level).
    ref_f32 = rnn_reference(x, params, matmul=_mm_f32)
    assert jnp.allclose(out, ref_f32, atol=5e-2, rtol=5e-2), (out, ref_f32)

    print("KERNEL_OK")
</pallas_src>

<mosaic_0001>
module attributes {stable_mosaic.version = 11 : i64} {
  func.func @_lstm_kernel(%arg0: memref<64x32xbf16, #tpu.memory_space<vmem>>, %arg1: memref<32x128xbf16, #tpu.memory_space<vmem>>, %arg2: memref<1x128xf32, #tpu.memory_space<vmem>>, %arg3: memref<64x256xbf16, #tpu.memory_space<vmem>>, %arg4: memref<1x128xf32, #tpu.memory_space<vmem>>, %arg5: memref<8x32xf32, #tpu.memory_space<vmem>>) attributes {dimension_semantics = [], scalar_prefetch = 0 : i64, scratch_operands = 0 : i64, tpu.core_type = #tpu.core_type<tc>} {
    %c0 = arith.constant 0 : index
    %c0_0 = arith.constant 0 : index
    %0 = vector.load %arg3[%c0, %c0_0] : memref<64x256xbf16, #tpu.memory_space<vmem>>, vector<64x256xbf16>
    %c0_1 = arith.constant 0 : index
    %c0_2 = arith.constant 0 : index
    %1 = vector.load %arg4[%c0_1, %c0_2] : memref<1x128xf32, #tpu.memory_space<vmem>>, vector<1x128xf32>
    %2 = vector.shape_cast %1 : vector<1x128xf32> to vector<1x128xf32>
    %3 = vector.broadcast %2 : vector<1x128xf32> to vector<8x128xf32>
    %c0_3 = arith.constant 0 : index
    %c0_4 = arith.constant 0 : index
    %4 = vector.load %arg0[%c0_3, %c0_4] : memref<64x32xbf16, #tpu.memory_space<vmem>>, vector<64x32xbf16>
    %c0_5 = arith.constant 0 : index
    %c0_6 = arith.constant 0 : index
    %5 = vector.load %arg1[%c0_5, %c0_6] : memref<32x128xbf16, #tpu.memory_space<vmem>>, vector<32x128xbf16>
    %cst = arith.constant dense<0.000000e+00> : vector<64x128xf32>
    %6 = tpu.matmul %4, %5, %cst {dimension_numbers = #tpu.dot_dimension_numbers<[1], [0], [0], [1], [0, 0, 1, 1], [], []>} : vector<64x32xbf16>, vector<32x128xbf16>, vector<64x128xf32> -> vector<64x128xf32>
    %c0_7 = arith.constant 0 : index
    %c0_8 = arith.constant 0 : index
    %7 = vector.load %arg2[%c0_7, %c0_8] : memref<1x128xf32, #tpu.memory_space<vmem>>, vector<1x128xf32>
    %8 = vector.broadcast %7 : vector<1x128xf32> to vector<64x128xf32>
    %9 = arith.addf %6, %8 : vector<64x128xf32>
    %10 = tpu.iota {dimensions = array<i32: 1>} : vector<8x128xi32>
    %c64_i32 = arith.constant 64 : i32
    %11 = vector.broadcast %c64_i32 : i32 to vector<8x128xi32>
    %12 = arith.cmpi sge, %10, %11 : vector<8x128xi32>
    %c96_i32 = arith.constant 96 : i32
    %13 = vector.broadcast %c96_i32 : i32 to vector<8x128xi32>
    %14 = arith.cmpi slt, %10, %13 : vector<8x128xi32>
    %15 = arith.andi %12, %14 : vector<8x128xi1>
    %cst_9 = arith.constant 0.000000e+00 : f32
    %16 = vector.broadcast %cst_9 : f32 to vector<8x32xf32>
    %17 = vector.extract_strided_slice %9 {offsets = [0, 0], sizes = [8, 128], strides = [1, 1]} : vector<64x128xf32> to vector<8x128xf32>
    %18 = math.tanh %17 : vector<8x128xf32>
    %19 = arith.negf %17 : vector<8x128xf32>
    %20 = math.exp %19 : vector<8x128xf32>
    %cst_10 = arith.constant 1.000000e+00 : f32
    %21 = vector.broadcast %cst_10 : f32 to vector<8x128xf32>
    %22 = arith.addf %21, %20 : vector<8x128xf32>
    %23 = arith.divf %21, %22 : vector<8x128xf32>
    %24 = arith.select %15, %18, %23 : vector<8x128xi1>, vector<8x128xf32>
    %25 = vector.extract_strided_slice %24 {offsets = [0, 0], sizes = [8, 32], strides = [1, 1]} : vector<8x128xf32> to vector<8x32xf32>
    %26 = vector.extract_strided_slice %24 {offsets = [0, 32], sizes = [8, 32], strides = [1, 1]} : vector<8x128xf32> to vector<8x32xf32>
    %27 = vector.extract_strided_slice %24 {offsets = [0, 64], sizes = [8, 32], strides = [1, 1]} : vector<8x128xf32> to vector<8x32xf32>
    %28 = vector.extract_strided_slice %24 {offsets = [0, 96], sizes = [8, 32], strides = [1, 1]} : vector<8x128xf32> to vector<8x32xf32>
    %29 = arith.mulf %26, %16 : vector<8x32xf32>
    %30 = arith.mulf %25, %27 : vector<8x32xf32>
    %31 = arith.addf %29, %30 : vector<8x32xf32>
    %32 = math.tanh %31 : vector<8x32xf32>
    %33 = arith.mulf %28, %32 : vector<8x32xf32>
    %34 = tpu.concatenate %33, %16 in 1 : vector<8x32xf32>, vector<8x32xf32> -> vector<8x64xf32>
    %35 = arith.truncf %34 : vector<8x64xf32> to vector<8x64xbf16>
    %cst_11 = arith.constant dense<0.000000e+00> : vector<8x256xf32>
    %36 = tpu.matmul %35, %0, %cst_11 {dimension_numbers = #tpu.dot_dimension_numbers<[1], [0], [0], [1], [0, 0, 1, 1], [], []>} : vector<8x64xbf16>, vector<64x256xbf16>, vector<8x256xf32> -> vector<8x256xf32>
    %37 = vector.extract_strided_slice %36 {offsets = [0, 128], sizes = [8, 128], strides = [1, 1]} : vector<8x256xf32> to vector<8x128xf32>
    %38 = arith.addf %37, %3 : vector<8x128xf32>
    %39 = math.tanh %38 : vector<8x128xf32>
    %40 = arith.negf %38 : vector<8x128xf32>
    %41 = math.exp %40 : vector<8x128xf32>
    %cst_12 = arith.constant 1.000000e+00 : f32
    %42 = vector.broadcast %cst_12 : f32 to vector<8x128xf32>
    %43 = arith.addf %42, %41 : vector<8x128xf32>
    %44 = arith.divf %42, %43 : vector<8x128xf32>
    %45 = arith.select %15, %39, %44 : vector<8x128xi1>, vector<8x128xf32>
    %46 = vector.extract_strided_slice %45 {offsets = [0, 0], sizes = [8, 32], strides = [1, 1]} : vector<8x128xf32> to vector<8x32xf32>
    %47 = vector.extract_strided_slice %45 {offsets = [0, 32], sizes = [8, 32], strides = [1, 1]} : vector<8x128xf32> to vector<8x32xf32>
    %48 = vector.extract_strided_slice %45 {offsets = [0, 64], sizes = [8, 32], strides = [1, 1]} : vector<8x128xf32> to vector<8x32xf32>
    %49 = vector.extract_strided_slice %45 {offsets = [0, 96], sizes = [8, 32], strides = [1, 1]} : vector<8x128xf32> to vector<8x32xf32>
    %50 = arith.mulf %47, %16 : vector<8x32xf32>
    %51 = arith.mulf %46, %48 : vector<8x32xf32>
    %52 = arith.addf %50, %51 : vector<8x32xf32>
    %53 = math.tanh %52 : vector<8x32xf32>
    %54 = arith.mulf %49, %53 : vector<8x32xf32>
    %55 = vector.extract_strided_slice %9 {offsets = [8, 0], sizes = [8, 128], strides = [1, 1]} : vector<64x128xf32> to vector<8x128xf32>
    %56 = vector.extract_strided_slice %36 {offsets = [0, 0], sizes = [8, 128], strides = [1, 1]} : vector<8x256xf32> to vector<8x128xf32>
    %57 = arith.addf %55, %56 : vector<8x128xf32>
    %58 = math.tanh %57 : vector<8x128xf32>
    %59 = arith.negf %57 : vector<8x128xf32>
    %60 = math.exp %59 : vector<8x128xf32>
    %cst_13 = arith.constant 1.000000e+00 : f32
    %61 = vector.broadcast %cst_13 : f32 to vector<8x128xf32>
    %62 = arith.addf %61, %60 : vector<8x128xf32>
    %63 = arith.divf %61, %62 : vector<8x128xf32>
    %64 = arith.select %15, %58, %63 : vector<8x128xi1>, vector<8x128xf32>
    %65 = vector.extract_strided_slice %64 {offsets = [0, 0], sizes = [8, 32], strides = [1, 1]} : vector<8x128xf32> to vector<8x32xf32>
    %66 = vector.extract_strided_slice %64 {offsets = [0, 32], sizes = [8, 32], strides = [1, 1]} : vector<8x128xf32> to vector<8x32xf32>
    %67 = vector.extract_strided_slice %64 {offsets = [0, 64], sizes = [8, 32], strides = [1, 1]} : vector<8x128xf32> to vector<8x32xf32>
    %68 = vector.extract_strided_slice %64 {offsets = [0, 96], sizes = [8, 32], strides = [1, 1]} : vector<8x128xf32> to vector<8x32xf32>
    %69 = arith.mulf %66, %31 : vector<8x32xf32>
    %70 = arith.mulf %65, %67 : vector<8x32xf32>
    %71 = arith.addf %69, %70 : vector<8x32xf32>
    %72 = math.tanh %71 : vector<8x32xf32>
    %73 = arith.mulf %68, %72 : vector<8x32xf32>
    %74 = tpu.concatenate %73, %54 in 1 : vector<8x32xf32>, vector<8x32xf32> -> vector<8x64xf32>
    %75 = arith.truncf %74 : vector<8x64xf32> to vector<8x64xbf16>
    %cst_14 = arith.constant dense<0.000000e+00> : vector<8x256xf32>
    %76 = tpu.matmul %75, %0, %cst_14 {dimension_numbers = #tpu.dot_dimension_numbers<[1], [0], [0], [1], [0, 0, 1, 1], [], []>} : vector<8x64xbf16>, vector<64x256xbf16>, vector<8x256xf32> -> vector<8x256xf32>
    %77 = vector.extract_strided_slice %76 {offsets = [0, 128], sizes = [8, 128], strides = [1, 1]} : vector<8x256xf32> to vector<8x128xf32>
    %78 = arith.addf %77, %3 : vector<8x128xf32>
    %79 = math.tanh %78 : vector<8x128xf32>
    %80 = arith.negf %78 : vector<8x128xf32>
    %81 = math.exp %80 : vector<8x128xf32>
    %cst_15 = arith.constant 1.000000e+00 : f32
    %82 = vector.broadcast %cst_15 : f32 to vector<8x128xf32>
    %83 = arith.addf %82, %81 : vector<8x128xf32>
    %84 = arith.divf %82, %83 : vector<8x128xf32>
    %85 = arith.select %15, %79, %84 : vector<8x128xi1>, vector<8x128xf32>
    %86 = vector.extract_strided_slice %85 {offsets = [0, 0], sizes = [8, 32], strides = [1, 1]} : vector<8x128xf32> to vector<8x32xf32>
    %87 = vector.extract_strided_slice %85 {offsets = [0, 32], sizes = [8, 32], strides = [1, 1]} : vector<8x128xf32> to vector<8x32xf32>
    %88 = vector.extract_strided_slice %85 {offsets = [0, 64], sizes = [8, 32], strides = [1, 1]} : vector<8x128xf32> to vector<8x32xf32>
    %89 = vector.extract_strided_slice %85 {offsets = [0, 96], sizes = [8, 32], strides = [1, 1]} : vector<8x128xf32> to vector<8x32xf32>
    %90 = arith.mulf %87, %52 : vector<8x32xf32>
    %91 = arith.mulf %86, %88 : vector<8x32xf32>
    %92 = arith.addf %90, %91 : vector<8x32xf32>
    %93 = math.tanh %92 : vector<8x32xf32>
    %94 = arith.mulf %89, %93 : vector<8x32xf32>
    %95 = vector.extract_strided_slice %9 {offsets = [16, 0], sizes = [8, 128], strides = [1, 1]} : vector<64x128xf32> to vector<8x128xf32>
    %96 = vector.extract_strided_slice %76 {offsets = [0, 0], sizes = [8, 128], strides = [1, 1]} : vector<8x256xf32> to vector<8x128xf32>
    %97 = arith.addf %95, %96 : vector<8x128xf32>
    %98 = math.tanh %97 : vector<8x128xf32>
    %99 = arith.negf %97 : vector<8x128xf32>
    %100 = math.exp %99 : vector<8x128xf32>
    %cst_16 = arith.constant 1.000000e+00 : f32
    %101 = vector.broadcast %cst_16 : f32 to vector<8x128xf32>
    %102 = arith.addf %101, %100 : vector<8x128xf32>
    %103 = arith.divf %101, %102 : vector<8x128xf32>
    %104 = arith.select %15, %98, %103 : vector<8x128xi1>, vector<8x128xf32>
    %105 = vector.extract_strided_slice %104 {offsets = [0, 0], sizes = [8, 32], strides = [1, 1]} : vector<8x128xf32> to vector<8x32xf32>
    %106 = vector.extract_strided_slice %104 {offsets = [0, 32], sizes = [8, 32], strides = [1, 1]} : vector<8x128xf32> to vector<8x32xf32>
    %107 = vector.extract_strided_slice %104 {offsets = [0, 64], sizes = [8, 32], strides = [1, 1]} : vector<8x128xf32> to vector<8x32xf32>
    %108 = vector.extract_strided_slice %104 {offsets = [0, 96], sizes = [8, 32], strides = [1, 1]} : vector<8x128xf32> to vector<8x32xf32>
    %109 = arith.mulf %106, %71 : vector<8x32xf32>
    %110 = arith.mulf %105, %107 : vector<8x32xf32>
    %111 = arith.addf %109, %110 : vector<8x32xf32>
    %112 = math.tanh %111 : vector<8x32xf32>
    %113 = arith.mulf %108, %112 : vector<8x32xf32>
    %114 = tpu.concatenate %113, %94 in 1 : vector<8x32xf32>, vector<8x32xf32> -> vector<8x64xf32>
    %115 = arith.truncf %114 : vector<8x64xf32> to vector<8x64xbf16>
    %cst_17 = arith.constant dense<0.000000e+00> : vector<8x256xf32>
    %116 = tpu.matmul %115, %0, %cst_17 {dimension_numbers = #tpu.dot_dimension_numbers<[1], [0], [0], [1], [0, 0, 1, 1], [], []>} : vector<8x64xbf16>, vector<64x256xbf16>, vector<8x256xf32> -> vector<8x256xf32>
    %117 = vector.extract_strided_slice %116 {offsets = [0, 128], sizes = [8, 128], strides = [1, 1]} : vector<8x256xf32> to vector<8x128xf32>
    %118 = arith.addf %117, %3 : vector<8x128xf32>
    %119 = math.tanh %118 : vector<8x128xf32>
    %120 = arith.negf %118 : vector<8x128xf32>
    %121 = math.exp %120 : vector<8x128xf32>
    %cst_18 = arith.constant 1.000000e+00 : f32
    %122 = vector.broadcast %cst_18 : f32 to vector<8x128xf32>
    %123 = arith.addf %122, %121 : vector<8x128xf32>
    %124 = arith.divf %122, %123 : vector<8x128xf32>
    %125 = arith.select %15, %119, %124 : vector<8x128xi1>, vector<8x128xf32>
    %126 = vector.extract_strided_slice %125 {offsets = [0, 0], sizes = [8, 32], strides = [1, 1]} : vector<8x128xf32> to vector<8x32xf32>
    %127 = vector.extract_strided_slice %125 {offsets = [0, 32], sizes = [8, 32], strides = [1, 1]} : vector<8x128xf32> to vector<8x32xf32>
    %128 = vector.extract_strided_slice %125 {offsets = [0, 64], sizes = [8, 32], strides = [1, 1]} : vector<8x128xf32> to vector<8x32xf32>
    %129 = vector.extract_strided_slice %125 {offsets = [0, 96], sizes = [8, 32], strides = [1, 1]} : vector<8x128xf32> to vector<8x32xf32>
    %130 = arith.mulf %127, %92 : vector<8x32xf32>
    %131 = arith.mulf %126, %128 : vector<8x32xf32>
    %132 = arith.addf %130, %131 : vector<8x32xf32>
    %133 = math.tanh %132 : vector<8x32xf32>
    %134 = arith.mulf %129, %133 : vector<8x32xf32>
    %135 = vector.extract_strided_slice %9 {offsets = [24, 0], sizes = [8, 128], strides = [1, 1]} : vector<64x128xf32> to vector<8x128xf32>
    %136 = vector.extract_strided_slice %116 {offsets = [0, 0], sizes = [8, 128], strides = [1, 1]} : vector<8x256xf32> to vector<8x128xf32>
    %137 = arith.addf %135, %136 : vector<8x128xf32>
    %138 = math.tanh %137 : vector<8x128xf32>
    %139 = arith.negf %137 : vector<8x128xf32>
    %140 = math.exp %139 : vector<8x128xf32>
    %cst_19 = arith.constant 1.000000e+00 : f32
    %141 = vector.broadcast %cst_19 : f32 to vector<8x128xf32>
    %142 = arith.addf %141, %140 : vector<8x128xf32>
    %143 = arith.divf %141, %142 : vector<8x128xf32>
    %144 = arith.select %15, %138, %143 : vector<8x128xi1>, vector<8x128xf32>
    %145 = vector.extract_strided_slice %144 {offsets = [0, 0], sizes = [8, 32], strides = [1, 1]} : vector<8x128xf32> to vector<8x32xf32>
    %146 = vector.extract_strided_slice %144 {offsets = [0, 32], sizes = [8, 32], strides = [1, 1]} : vector<8x128xf32> to vector<8x32xf32>
    %147 = vector.extract_strided_slice %144 {offsets = [0, 64], sizes = [8, 32], strides = [1, 1]} : vector<8x128xf32> to vector<8x32xf32>
    %148 = vector.extract_strided_slice %144 {offsets = [0, 96], sizes = [8, 32], strides = [1, 1]} : vector<8x128xf32> to vector<8x32xf32>
    %149 = arith.mulf %146, %111 : vector<8x32xf32>
    %150 = arith.mulf %145, %147 : vector<8x32xf32>
    %151 = arith.addf %149, %150 : vector<8x32xf32>
    %152 = math.tanh %151 : vector<8x32xf32>
    %153 = arith.mulf %148, %152 : vector<8x32xf32>
    %154 = tpu.concatenate %153, %134 in 1 : vector<8x32xf32>, vector<8x32xf32> -> vector<8x64xf32>
    %155 = arith.truncf %154 : vector<8x64xf32> to vector<8x64xbf16>
    %cst_20 = arith.constant dense<0.000000e+00> : vector<8x256xf32>
    %156 = tpu.matmul %155, %0, %cst_20 {dimension_numbers = #tpu.dot_dimension_numbers<[1], [0], [0], [1], [0, 0, 1, 1], [], []>} : vector<8x64xbf16>, vector<64x256xbf16>, vector<8x256xf32> -> vector<8x256xf32>
    %157 = vector.extract_strided_slice %156 {offsets = [0, 128], sizes = [8, 128], strides = [1, 1]} : vector<8x256xf32> to vector<8x128xf32>
    %158 = arith.addf %157, %3 : vector<8x128xf32>
    %159 = math.tanh %158 : vector<8x128xf32>
    %160 = arith.negf %158 : vector<8x128xf32>
    %161 = math.exp %160 : vector<8x128xf32>
    %cst_21 = arith.constant 1.000000e+00 : f32
    %162 = vector.broadcast %cst_21 : f32 to vector<8x128xf32>
    %163 = arith.addf %162, %161 : vector<8x128xf32>
    %164 = arith.divf %162, %163 : vector<8x128xf32>
    %165 = arith.select %15, %159, %164 : vector<8x128xi1>, vector<8x128xf32>
    %166 = vector.extract_strided_slice %165 {offsets = [0, 0], sizes = [8, 32], strides = [1, 1]} : vector<8x128xf32> to vector<8x32xf32>
    %167 = vector.extract_strided_slice %165 {offsets = [0, 32], sizes = [8, 32], strides = [1, 1]} : vector<8x128xf32> to vector<8x32xf32>
    %168 = vector.extract_strided_slice %165 {offsets = [0, 64], sizes = [8, 32], strides = [1, 1]} : vector<8x128xf32> to vector<8x32xf32>
    %169 = vector.extract_strided_slice %165 {offsets = [0, 96], sizes = [8, 32], strides = [1, 1]} : vector<8x128xf32> to vector<8x32xf32>
    %170 = arith.mulf %167, %132 : vector<8x32xf32>
    %171 = arith.mulf %166, %168 : vector<8x32xf32>
    %172 = arith.addf %170, %171 : vector<8x32xf32>
    %173 = math.tanh %172 : vector<8x32xf32>
    %174 = arith.mulf %169, %173 : vector<8x32xf32>
    %175 = vector.extract_strided_slice %9 {offsets = [32, 0], sizes = [8, 128], strides = [1, 1]} : vector<64x128xf32> to vector<8x128xf32>
    %176 = vector.extract_strided_slice %156 {offsets = [0, 0], sizes = [8, 128], strides = [1, 1]} : vector<8x256xf32> to vector<8x128xf32>
    %177 = arith.addf %175, %176 : vector<8x128xf32>
    %178 = math.tanh %177 : vector<8x128xf32>
    %179 = arith.negf %177 : vector<8x128xf32>
    %180 = math.exp %179 : vector<8x128xf32>
    %cst_22 = arith.constant 1.000000e+00 : f32
    %181 = vector.broadcast %cst_22 : f32 to vector<8x128xf32>
    %182 = arith.addf %181, %180 : vector<8x128xf32>
    %183 = arith.divf %181, %182 : vector<8x128xf32>
    %184 = arith.select %15, %178, %183 : vector<8x128xi1>, vector<8x128xf32>
    %185 = vector.extract_strided_slice %184 {offsets = [0, 0], sizes = [8, 32], strides = [1, 1]} : vector<8x128xf32> to vector<8x32xf32>
    %186 = vector.extract_strided_slice %184 {offsets = [0, 32], sizes = [8, 32], strides = [1, 1]} : vector<8x128xf32> to vector<8x32xf32>
    %187 = vector.extract_strided_slice %184 {offsets = [0, 64], sizes = [8, 32], strides = [1, 1]} : vector<8x128xf32> to vector<8x32xf32>
    %188 = vector.extract_strided_slice %184 {offsets = [0, 96], sizes = [8, 32], strides = [1, 1]} : vector<8x128xf32> to vector<8x32xf32>
    %189 = arith.mulf %186, %151 : vector<8x32xf32>
    %190 = arith.mulf %185, %187 : vector<8x32xf32>
    %191 = arith.addf %189, %190 : vector<8x32xf32>
    %192 = math.tanh %191 : vector<8x32xf32>
    %193 = arith.mulf %188, %192 : vector<8x32xf32>
    %194 = tpu.concatenate %193, %174 in 1 : vector<8x32xf32>, vector<8x32xf32> -> vector<8x64xf32>
    %195 = arith.truncf %194 : vector<8x64xf32> to vector<8x64xbf16>
    %cst_23 = arith.constant dense<0.000000e+00> : vector<8x256xf32>
    %196 = tpu.matmul %195, %0, %cst_23 {dimension_numbers = #tpu.dot_dimension_numbers<[1], [0], [0], [1], [0, 0, 1, 1], [], []>} : vector<8x64xbf16>, vector<64x256xbf16>, vector<8x256xf32> -> vector<8x256xf32>
    %197 = vector.extract_strided_slice %196 {offsets = [0, 128], sizes = [8, 128], strides = [1, 1]} : vector<8x256xf32> to vector<8x128xf32>
    %198 = arith.addf %197, %3 : vector<8x128xf32>
    %199 = math.tanh %198 : vector<8x128xf32>
    %200 = arith.negf %198 : vector<8x128xf32>
    %201 = math.exp %200 : vector<8x128xf32>
    %cst_24 = arith.constant 1.000000e+00 : f32
    %202 = vector.broadcast %cst_24 : f32 to vector<8x128xf32>
    %203 = arith.addf %202, %201 : vector<8x128xf32>
    %204 = arith.divf %202, %203 : vector<8x128xf32>
    %205 = arith.select %15, %199, %204 : vector<8x128xi1>, vector<8x128xf32>
    %206 = vector.extract_strided_slice %205 {offsets = [0, 0], sizes = [8, 32], strides = [1, 1]} : vector<8x128xf32> to vector<8x32xf32>
    %207 = vector.extract_strided_slice %205 {offsets = [0, 32], sizes = [8, 32], strides = [1, 1]} : vector<8x128xf32> to vector<8x32xf32>
    %208 = vector.extract_strided_slice %205 {offsets = [0, 64], sizes = [8, 32], strides = [1, 1]} : vector<8x128xf32> to vector<8x32xf32>
    %209 = vector.extract_strided_slice %205 {offsets = [0, 96], sizes = [8, 32], strides = [1, 1]} : vector<8x128xf32> to vector<8x32xf32>
    %210 = arith.mulf %207, %172 : vector<8x32xf32>
    %211 = arith.mulf %206, %208 : vector<8x32xf32>
    %212 = arith.addf %210, %211 : vector<8x32xf32>
    %213 = math.tanh %212 : vector<8x32xf32>
    %214 = arith.mulf %209, %213 : vector<8x32xf32>
    %215 = vector.extract_strided_slice %9 {offsets = [40, 0], sizes = [8, 128], strides = [1, 1]} : vector<64x128xf32> to vector<8x128xf32>
    %216 = vector.extract_strided_slice %196 {offsets = [0, 0], sizes = [8, 128], strides = [1, 1]} : vector<8x256xf32> to vector<8x128xf32>
    %217 = arith.addf %215, %216 : vector<8x128xf32>
    %218 = math.tanh %217 : vector<8x128xf32>
    %219 = arith.negf %217 : vector<8x128xf32>
    %220 = math.exp %219 : vector<8x128xf32>
    %cst_25 = arith.constant 1.000000e+00 : f32
    %221 = vector.broadcast %cst_25 : f32 to vector<8x128xf32>
    %222 = arith.addf %221, %220 : vector<8x128xf32>
    %223 = arith.divf %221, %222 : vector<8x128xf32>
    %224 = arith.select %15, %218, %223 : vector<8x128xi1>, vector<8x128xf32>
    %225 = vector.extract_strided_slice %224 {offsets = [0, 0], sizes = [8, 32], strides = [1, 1]} : vector<8x128xf32> to vector<8x32xf32>
    %226 = vector.extract_strided_slice %224 {offsets = [0, 32], sizes = [8, 32], strides = [1, 1]} : vector<8x128xf32> to vector<8x32xf32>
    %227 = vector.extract_strided_slice %224 {offsets = [0, 64], sizes = [8, 32], strides = [1, 1]} : vector<8x128xf32> to vector<8x32xf32>
    %228 = vector.extract_strided_slice %224 {offsets = [0, 96], sizes = [8, 32], strides = [1, 1]} : vector<8x128xf32> to vector<8x32xf32>
    %229 = arith.mulf %226, %191 : vector<8x32xf32>
    %230 = arith.mulf %225, %227 : vector<8x32xf32>
    %231 = arith.addf %229, %230 : vector<8x32xf32>
    %232 = math.tanh %231 : vector<8x32xf32>
    %233 = arith.mulf %228, %232 : vector<8x32xf32>
    %234 = tpu.concatenate %233, %214 in 1 : vector<8x32xf32>, vector<8x32xf32> -> vector<8x64xf32>
    %235 = arith.truncf %234 : vector<8x64xf32> to vector<8x64xbf16>
    %cst_26 = arith.constant dense<0.000000e+00> : vector<8x256xf32>
    %236 = tpu.matmul %235, %0, %cst_26 {dimension_numbers = #tpu.dot_dimension_numbers<[1], [0], [0], [1], [0, 0, 1, 1], [], []>} : vector<8x64xbf16>, vector<64x256xbf16>, vector<8x256xf32> -> vector<8x256xf32>
    %237 = vector.extract_strided_slice %236 {offsets = [0, 128], sizes = [8, 128], strides = [1, 1]} : vector<8x256xf32> to vector<8x128xf32>
    %238 = arith.addf %237, %3 : vector<8x128xf32>
    %239 = math.tanh %238 : vector<8x128xf32>
    %240 = arith.negf %238 : vector<8x128xf32>
    %241 = math.exp %240 : vector<8x128xf32>
    %cst_27 = arith.constant 1.000000e+00 : f32
    %242 = vector.broadcast %cst_27 : f32 to vector<8x128xf32>
    %243 = arith.addf %242, %241 : vector<8x128xf32>
    %244 = arith.divf %242, %243 : vector<8x128xf32>
    %245 = arith.select %15, %239, %244 : vector<8x128xi1>, vector<8x128xf32>
    %246 = vector.extract_strided_slice %245 {offsets = [0, 0], sizes = [8, 32], strides = [1, 1]} : vector<8x128xf32> to vector<8x32xf32>
    %247 = vector.extract_strided_slice %245 {offsets = [0, 32], sizes = [8, 32], strides = [1, 1]} : vector<8x128xf32> to vector<8x32xf32>
    %248 = vector.extract_strided_slice %245 {offsets = [0, 64], sizes = [8, 32], strides = [1, 1]} : vector<8x128xf32> to vector<8x32xf32>
    %249 = vector.extract_strided_slice %245 {offsets = [0, 96], sizes = [8, 32], strides = [1, 1]} : vector<8x128xf32> to vector<8x32xf32>
    %250 = arith.mulf %247, %212 : vector<8x32xf32>
    %251 = arith.mulf %246, %248 : vector<8x32xf32>
    %252 = arith.addf %250, %251 : vector<8x32xf32>
    %253 = math.tanh %252 : vector<8x32xf32>
    %254 = arith.mulf %249, %253 : vector<8x32xf32>
    %255 = vector.extract_strided_slice %9 {offsets = [48, 0], sizes = [8, 128], strides = [1, 1]} : vector<64x128xf32> to vector<8x128xf32>
    %256 = vector.extract_strided_slice %236 {offsets = [0, 0], sizes = [8, 128], strides = [1, 1]} : vector<8x256xf32> to vector<8x128xf32>
    %257 = arith.addf %255, %256 : vector<8x128xf32>
    %258 = math.tanh %257 : vector<8x128xf32>
    %259 = arith.negf %257 : vector<8x128xf32>
    %260 = math.exp %259 : vector<8x128xf32>
    %cst_28 = arith.constant 1.000000e+00 : f32
    %261 = vector.broadcast %cst_28 : f32 to vector<8x128xf32>
    %262 = arith.addf %261, %260 : vector<8x128xf32>
    %263 = arith.divf %261, %262 : vector<8x128xf32>
    %264 = arith.select %15, %258, %263 : vector<8x128xi1>, vector<8x128xf32>
    %265 = vector.extract_strided_slice %264 {offsets = [0, 0], sizes = [8, 32], strides = [1, 1]} : vector<8x128xf32> to vector<8x32xf32>
    %266 = vector.extract_strided_slice %264 {offsets = [0, 32], sizes = [8, 32], strides = [1, 1]} : vector<8x128xf32> to vector<8x32xf32>
    %267 = vector.extract_strided_slice %264 {offsets = [0, 64], sizes = [8, 32], strides = [1, 1]} : vector<8x128xf32> to vector<8x32xf32>
    %268 = vector.extract_strided_slice %264 {offsets = [0, 96], sizes = [8, 32], strides = [1, 1]} : vector<8x128xf32> to vector<8x32xf32>
    %269 = arith.mulf %266, %231 : vector<8x32xf32>
    %270 = arith.mulf %265, %267 : vector<8x32xf32>
    %271 = arith.addf %269, %270 : vector<8x32xf32>
    %272 = math.tanh %271 : vector<8x32xf32>
    %273 = arith.mulf %268, %272 : vector<8x32xf32>
    %274 = tpu.concatenate %273, %254 in 1 : vector<8x32xf32>, vector<8x32xf32> -> vector<8x64xf32>
    %275 = arith.truncf %274 : vector<8x64xf32> to vector<8x64xbf16>
    %cst_29 = arith.constant dense<0.000000e+00> : vector<8x256xf32>
    %276 = tpu.matmul %275, %0, %cst_29 {dimension_numbers = #tpu.dot_dimension_numbers<[1], [0], [0], [1], [0, 0, 1, 1], [], []>} : vector<8x64xbf16>, vector<64x256xbf16>, vector<8x256xf32> -> vector<8x256xf32>
    %277 = vector.extract_strided_slice %276 {offsets = [0, 128], sizes = [8, 128], strides = [1, 1]} : vector<8x256xf32> to vector<8x128xf32>
    %278 = arith.addf %277, %3 : vector<8x128xf32>
    %279 = math.tanh %278 : vector<8x128xf32>
    %280 = arith.negf %278 : vector<8x128xf32>
    %281 = math.exp %280 : vector<8x128xf32>
    %cst_30 = arith.constant 1.000000e+00 : f32
    %282 = vector.broadcast %cst_30 : f32 to vector<8x128xf32>
    %283 = arith.addf %282, %281 : vector<8x128xf32>
    %284 = arith.divf %282, %283 : vector<8x128xf32>
    %285 = arith.select %15, %279, %284 : vector<8x128xi1>, vector<8x128xf32>
    %286 = vector.extract_strided_slice %285 {offsets = [0, 0], sizes = [8, 32], strides = [1, 1]} : vector<8x128xf32> to vector<8x32xf32>
    %287 = vector.extract_strided_slice %285 {offsets = [0, 32], sizes = [8, 32], strides = [1, 1]} : vector<8x128xf32> to vector<8x32xf32>
    %288 = vector.extract_strided_slice %285 {offsets = [0, 64], sizes = [8, 32], strides = [1, 1]} : vector<8x128xf32> to vector<8x32xf32>
    %289 = vector.extract_strided_slice %285 {offsets = [0, 96], sizes = [8, 32], strides = [1, 1]} : vector<8x128xf32> to vector<8x32xf32>
    %290 = arith.mulf %287, %252 : vector<8x32xf32>
    %291 = arith.mulf %286, %288 : vector<8x32xf32>
    %292 = arith.addf %290, %291 : vector<8x32xf32>
    %293 = math.tanh %292 : vector<8x32xf32>
    %294 = arith.mulf %289, %293 : vector<8x32xf32>
    %295 = vector.extract_strided_slice %9 {offsets = [56, 0], sizes = [8, 128], strides = [1, 1]} : vector<64x128xf32> to vector<8x128xf32>
    %296 = vector.extract_strided_slice %276 {offsets = [0, 0], sizes = [8, 128], strides = [1, 1]} : vector<8x256xf32> to vector<8x128xf32>
    %297 = arith.addf %295, %296 : vector<8x128xf32>
    %298 = math.tanh %297 : vector<8x128xf32>
    %299 = arith.negf %297 : vector<8x128xf32>
    %300 = math.exp %299 : vector<8x128xf32>
    %cst_31 = arith.constant 1.000000e+00 : f32
    %301 = vector.broadcast %cst_31 : f32 to vector<8x128xf32>
    %302 = arith.addf %301, %300 : vector<8x128xf32>
    %303 = arith.divf %301, %302 : vector<8x128xf32>
    %304 = arith.select %15, %298, %303 : vector<8x128xi1>, vector<8x128xf32>
    %305 = vector.extract_strided_slice %304 {offsets = [0, 0], sizes = [8, 32], strides = [1, 1]} : vector<8x128xf32> to vector<8x32xf32>
    %306 = vector.extract_strided_slice %304 {offsets = [0, 32], sizes = [8, 32], strides = [1, 1]} : vector<8x128xf32> to vector<8x32xf32>
    %307 = vector.extract_strided_slice %304 {offsets = [0, 64], sizes = [8, 32], strides = [1, 1]} : vector<8x128xf32> to vector<8x32xf32>
    %308 = vector.extract_strided_slice %304 {offsets = [0, 96], sizes = [8, 32], strides = [1, 1]} : vector<8x128xf32> to vector<8x32xf32>
    %309 = arith.mulf %306, %271 : vector<8x32xf32>
    %310 = arith.mulf %305, %307 : vector<8x32xf32>
    %311 = arith.addf %309, %310 : vector<8x32xf32>
    %312 = math.tanh %311 : vector<8x32xf32>
    %313 = arith.mulf %308, %312 : vector<8x32xf32>
    %314 = tpu.concatenate %313, %294 in 1 : vector<8x32xf32>, vector<8x32xf32> -> vector<8x64xf32>
    %315 = arith.truncf %314 : vector<8x64xf32> to vector<8x64xbf16>
    %cst_32 = arith.constant dense<0.000000e+00> : vector<8x256xf32>
    %316 = tpu.matmul %315, %0, %cst_32 {dimension_numbers = #tpu.dot_dimension_numbers<[1], [0], [0], [1], [0, 0, 1, 1], [], []>} : vector<8x64xbf16>, vector<64x256xbf16>, vector<8x256xf32> -> vector<8x256xf32>
    %317 = vector.extract_strided_slice %316 {offsets = [0, 128], sizes = [8, 128], strides = [1, 1]} : vector<8x256xf32> to vector<8x128xf32>
    %318 = arith.addf %317, %3 : vector<8x128xf32>
    %319 = math.tanh %318 : vector<8x128xf32>
    %320 = arith.negf %318 : vector<8x128xf32>
    %321 = math.exp %320 : vector<8x128xf32>
    %cst_33 = arith.constant 1.000000e+00 : f32
    %322 = vector.broadcast %cst_33 : f32 to vector<8x128xf32>
    %323 = arith.addf %322, %321 : vector<8x128xf32>
    %324 = arith.divf %322, %323 : vector<8x128xf32>
    %325 = arith.select %15, %319, %324 : vector<8x128xi1>, vector<8x128xf32>
    %326 = vector.extract_strided_slice %325 {offsets = [0, 0], sizes = [8, 32], strides = [1, 1]} : vector<8x128xf32> to vector<8x32xf32>
    %327 = vector.extract_strided_slice %325 {offsets = [0, 32], sizes = [8, 32], strides = [1, 1]} : vector<8x128xf32> to vector<8x32xf32>
    %328 = vector.extract_strided_slice %325 {offsets = [0, 64], sizes = [8, 32], strides = [1, 1]} : vector<8x128xf32> to vector<8x32xf32>
    %329 = vector.extract_strided_slice %325 {offsets = [0, 96], sizes = [8, 32], strides = [1, 1]} : vector<8x128xf32> to vector<8x32xf32>
    %330 = arith.mulf %327, %292 : vector<8x32xf32>
    %331 = arith.mulf %326, %328 : vector<8x32xf32>
    %332 = arith.addf %330, %331 : vector<8x32xf32>
    %333 = math.tanh %332 : vector<8x32xf32>
    %334 = arith.mulf %329, %333 : vector<8x32xf32>
    %c0_34 = arith.constant 0 : index
    %c0_35 = arith.constant 0 : index
    %335 = vector.load %arg5[%c0_34, %c0_35] : memref<8x32xf32, #tpu.memory_space<vmem>>, vector<8x32xf32>
    tpu.vector_store %arg5[%c0_34, %c0_35], %334 {strides = array<i32>} : memref<8x32xf32, #tpu.memory_space<vmem>>, vector<8x32xf32>,
    return
  }
}

</mosaic_0001>

<llo_original>
// kernel: rnn_forward.1
$region0: #{rnn_forward.1}
  #allocation0 [shape = 'u32[]', space=smem, size = 0x4, offset = 0x4, fixed_abs, tag = 'smem constant byte address 0x4 - core index']
  #allocation1 [shape = 'u32[144,128]{1,0:T(1,128)}', space=vmem, size = 0x12000, scoped, tag = 'internal scratch']
  %s0 = inlined_call_operand.vmem [shape: bf16[64,32], index: 0, kind: input, shape index: {}]
  %s1 = inlined_call_operand.vmem [shape: bf16[32,128], index: 1, kind: input, shape index: {}]
  %s2 = inlined_call_operand.vmem [shape: f32[1,128], index: 2, kind: input, shape index: {}]
  %s3 = inlined_call_operand.vmem [shape: bf16[64,256], index: 3, kind: input, shape index: {}]
  %s4 = inlined_call_operand.vmem [shape: f32[1,128], index: 4, kind: input, shape index: {}]
  %s5 = inlined_call_operand.vmem [shape: f32[8,32], index: 5, kind: output, shape index: {}]
  %s6 = sld [smem:[#allocation0]]
  $region30: #{rnn_forward.1} parent=0
    _
  %s8 = ssub.s32 1, %s6
  %s9 = scalar_select 0, %s8, %s6
  // Predicated region
  $region2: #{rnn_forward.1} parent=0 // pred_check
    _
  $region3: #{rnn_forward.1} parent=0 // pred_check_branch
    %11 = sbr.rel (0) target = $region5
  $region4: #{rnn_forward.1} parent=0 // pred_region
    _
  $region5: #{rnn_forward.1} parent=0 // pred_fallthru
    _
  // Predicated region
  $region6: #{rnn_forward.1} parent=0 // pred_check
    _
  $region7: #{rnn_forward.1} parent=0 // pred_check_branch
    %13 = sbr.rel (0) target = $region9
  $region8: #{rnn_forward.1} parent=0 // pred_region
    _
  $region9: #{rnn_forward.1} parent=0 // pred_fallthru
    _
  // Predicated region
  $region10: #{rnn_forward.1} parent=0 // pred_check
    _
  $region11: #{rnn_forward.1} parent=0 // pred_check_branch
    %15 = sbr.rel (0) target = $region13
  $region12: #{rnn_forward.1} parent=0 // pred_region
    _
  $region13: #{rnn_forward.1} parent=0 // pred_fallthru
    _
  // Predicated region
  $region14: #{rnn_forward.1} parent=0 // pred_check
    _
  $region15: #{rnn_forward.1} parent=0 // pred_check_branch
    %17 = sbr.rel (0) target = $region17
  $region16: #{rnn_forward.1} parent=0 // pred_region
    _
  $region17: #{rnn_forward.1} parent=0 // pred_fallthru
    _
  // Predicated region
  $region18: #{rnn_forward.1} parent=0 // pred_check
    _
  $region19: #{rnn_forward.1} parent=0 // pred_check_branch
    %19 = sbr.rel (0) target = $region21
  $region20: #{rnn_forward.1} parent=0 // pred_region
    _
  $region21: #{rnn_forward.1} parent=0 // pred_fallthru
    _
  %v21 = vld [vmem:[%s3] sm:$0xff]
  %v22 = vld [vmem:[%s3 + $0x8] sm:$0xff]
  %v23 = vld [vmem:[%s3 + $0x10] sm:$0xff]
  %v24 = vld [vmem:[%s3 + $0x18] sm:$0xff]
  %v25 = vld [vmem:[%s3 + $0x20] sm:$0xff]
  %v26 = vld [vmem:[%s3 + $0x28] sm:$0xff]
  %v27 = vld [vmem:[%s3 + $0x30] sm:$0xff]
  %v28 = vld [vmem:[%s3 + $0x38] sm:$0xff]
  %v29 = vld [vmem:[%s4] sm:$0x1]
  %v31 = vlaneseq
  %v32 = vshrl.u32 %v31, 7
  %v33 = vsub.s32 0, %v32
  %v34 = vrot.slane %v29, %v33
  %v36 = vld [vmem:[%s0] sm:$0xf]
  %v37 = vld [vmem:[%s0 + $0x4] sm:$0xf]
  %v38 = vld [vmem:[%s0 + $0x8] sm:$0xf]
  %v39 = vld [vmem:[%s0 + $0xc] sm:$0xf]
  %v40 = vld [vmem:[%s0 + $0x10] sm:$0xf]
  %v41 = vld [vmem:[%s0 + $0x14] sm:$0xf]
  %v42 = vld [vmem:[%s0 + $0x18] sm:$0xf]
  %v43 = vld [vmem:[%s0 + $0x1c] sm:$0xf]
  %v44 = vld [vmem:[%s1] sm:$0xf]
  %v45 = vld [vmem:[%s1 + $0x4] sm:$0xf]
  %v46 = vld [vmem:[%s1 + $0x8] sm:$0xf]
  %v47 = vld [vmem:[%s1 + $0xc] sm:$0xf]
  %v48 = vld [vmem:[%s2] sm:$0x1]
  %v50 = vlaneseq
  %v51 = vshrl.u32 %v50, 7
  %v52 = vsub.s32 0, %v51
  %v53 = vrot.slane %v48, %v52
  %v63 = vunpack.c.l.b16 %v36
  %v64 = vunpack.c.l.b16 %v37
  %v65 = vunpack.c.l.b16 %v38
  %v66 = vunpack.c.l.b16 %v39
  %v67 = vunpack.c.l.b16 %v40
  %v68 = vunpack.c.l.b16 %v41
  %v69 = vunpack.c.l.b16 %v42
  %v70 = vunpack.c.l.b16 %v43
  %v71 = vpack.c.b16 %v64, %v63
  %v72 = vpack.c.b16 %v66, %v65
  %v73 = vpack.c.b16 %v68, %v67
  %v74 = vpack.c.b16 %v70, %v69
  %v79 = vunpack.c.l.b16 %v44
  %v80 = vunpack.c.l.b16 %v45
  %v81 = vunpack.c.l.b16 %v46
  %v82 = vunpack.c.l.b16 %v47
  %v83 = vpack.c.b16 %v80, %v79
  %v84 = vpack.c.b16 %v82, %v81
  %vm87 = vcmask 261120
  %v89 = vsel %vm87, %v71, 0
  %v92 = vsel %vm87, %v72, 0
  %v95 = vsel %vm87, %v73, 0
  %v98 = vsel %vm87, %v74, 0
  %100 = vmatprep.subr.bf16.mxu0 0
  %101 = vmatpush1.bf16.msra.mxu0 %v83
  %102 = vmatprep.subr.bf16.mxu0 0
  %103 = vmatpush1.bf16.msra.mxu0 %v84
  %104 = vmatprep.subr.bf16.mxu0 0
  %105 = vmatpush1.bf16.msra.mxu0 0
  %106 = vmatprep.subr.bf16.mxu0 0
  %107 = vmatpush1.bf16.msra.mxu0 0
  %108 = vmatprep.subr.bf16.mxu0 0
  %109 = vmatpush1.bf16.msra.mxu0 0
  %110 = vmatprep.subr.bf16.mxu0 0
  %111 = vmatpush1.bf16.msra.mxu0 0
  %112 = vmatprep.subr.bf16.mxu0 0
  %113 = vmatpush1.bf16.msra.mxu0 0
  %114 = vmatprep.subr.bf16.mxu0 0
  %115 = vmatpush1.bf16.msra.mxu0 0
  %116 = vmatprep.subr.bf16.mxu0 0
  %117 = vmatpush1.bf16.msra.mxu0 0
  %118 = vmatprep.subr.bf16.mxu0 0
  %119 = vmatpush1.bf16.msra.mxu0 0
  %120 = vmatprep.subr.bf16.mxu0 0
  %121 = vmatpush1.bf16.msra.mxu0 0
  %122 = vmatprep.subr.bf16.mxu0 0
  %123 = vmatpush1.bf16.msra.mxu0 0
  %124 = vmatprep.subr.bf16.mxu0 0
  %125 = vmatpush1.bf16.msra.mxu0 0
  %126 = vmatprep.subr.bf16.mxu0 0
  %127 = vmatpush1.bf16.msra.mxu0 0
  %128 = vmatprep.subr.bf16.mxu0 0
  %129 = vmatpush1.bf16.msra.mxu0 0
  %130 = vmatprep.subr.bf16.mxu0 0
  %131 = vmatpush1.bf16.msra.mxu0 0
  %132 = vmatprep.mubr.bf16.mxu0 0
  %133 = vmatmul.mubr.bf16.gmra.mrb[0].mxu0 %v89
  %v134 = vpop.f32.mrb[0].mxu0
  %v135 = vadd.f32 %v53, %v134
  %v136 = vpop.f32.mrb[0].mxu0
  %v137 = vpop.f32.mrb[0].mxu0
  %v138 = vadd.f32 %v53, %v137
  %v139 = vpop.f32.mrb[0].mxu0
  %140 = vmatprep.mubr.bf16.mxu0 0
  %141 = vmatmul.mubr.bf16.gmra.mrb[0].mxu0 %v92
  %v142 = vpop.f32.mrb[0].mxu0
  %v143 = vadd.f32 %v53, %v142
  %v144 = vpop.f32.mrb[0].mxu0
  %v145 = vpop.f32.mrb[0].mxu0
  %v146 = vadd.f32 %v53, %v145
  %v147 = vpop.f32.mrb[0].mxu0
  %148 = vmatprep.mubr.bf16.mxu0 0
  %149 = vmatmul.mubr.bf16.gmra.mrb[0].mxu0 %v95
  %v150 = vpop.f32.mrb[0].mxu0
  %v151 = vadd.f32 %v53, %v150
  %v152 = vpop.f32.mrb[0].mxu0
  %v153 = vpop.f32.mrb[0].mxu0
  %v154 = vadd.f32 %v53, %v153
  %v155 = vpop.f32.mrb[0].mxu0
  %156 = vmatprep.mubr.bf16.mxu0 0
  %157 = vmatmul.mubr.bf16.gmra.mrb[0].mxu0 %v98
  %v158 = vpop.f32.mrb[0].mxu0
  %v159 = vadd.f32 %v53, %v158
  %v160 = vpop.f32.mrb[0].mxu0
  %v161 = vpop.f32.mrb[0].mxu0
  %v162 = vadd.f32 %v53, %v161
  %v163 = vpop.f32.mrb[0].mxu0
  %164 = vdwg.mxu0
  %v165 = vlaneseq
  %v166 = vand.u32 %v165, 127
  %vm167 = vcmp.ge.s32.totalorder %v166, 64
  %vm168 = vcmp.lt.s32.totalorder %v166, 96
  %vm169 = vmand %vm167, %vm168
  %v170 = vtanh.pop %v135
  %v171 = vxor.u32 %v135, 2147483648
  %v172 = vmul.f32 %v171, 1.442695
  %v173 = vpow.pop %v172
  %v174 = vadd.f32 %v173, 1.0
  %v175 = vrcp.pop %v174
  %v176 = vmul.f32 1.0, %v175
  %v177 = vsel %vm169, %v170, %v176
  %v178 = vmul.f32 %v177, 0.0
  %180 = vrot.lane.b32.xlu0 %v177, 64
  %v181 = vpop.permute.xlu0 %180
  %v183 = vmul.f32 %v177, %v181
  %185 = vrot.lane.b32.xlu0 %v183, 32
  %v186 = vpop.permute.xlu0 %185
  %v188 = vadd.f32 %v178, %v186
  %v189 = vtanh.pop %v188
  %191 = vrot.lane.b32.xlu0 %v189, 64
  %v192 = vpop.permute.xlu0 %191
  %v194 = vmul.f32 %v177, %v192
  %196 = vrot.lane.b32.xlu0 %v194, 32
  %v197 = vpop.permute.xlu0 %196
  %v199 = vsel %vm87, %v197, 0.0
  %v200 = vpack.c.bf16 %v199, %v199
  %v209 = vunpack.c.l.b16 %v21
  %v210 = vunpack.c.h.b16 %v21
  %v211 = vunpack.c.l.b16 %v22
  %v212 = vunpack.c.h.b16 %v22
  %v213 = vunpack.c.l.b16 %v23
  %v214 = vunpack.c.h.b16 %v23
  %v215 = vunpack.c.l.b16 %v24
  %v216 = vunpack.c.h.b16 %v24
  %v217 = vunpack.c.l.b16 %v25
  %v218 = vunpack.c.h.b16 %v25
  %v219 = vunpack.c.l.b16 %v26
  %v220 = vunpack.c.h.b16 %v26
  %v221 = vunpack.c.l.b16 %v27
  %v222 = vunpack.c.h.b16 %v27
  %v223 = vunpack.c.l.b16 %v28
  %v224 = vunpack.c.h.b16 %v28
  %v225 = vpack.c.b16 %v211, %v209
  %v226 = vpack.c.b16 %v212, %v210
  %v227 = vpack.c.b16 %v215, %v213
  %v228 = vpack.c.b16 %v216, %v214
  %v229 = vpack.c.b16 %v219, %v217
  %v230 = vpack.c.b16 %v220, %v218
  %v231 = vpack.c.b16 %v223, %v221
  %v232 = vpack.c.b16 %v224, %v222
  %vm241 = vcmask 523264
  %v243 = vsel %vm241, %v200, 0
  %245 = vmatprep.subr.bf16.mxu0 %v226
  %246 = vmatpush1.bf16.msra.mxu0 %v225
  %247 = vmatprep.subr.bf16.mxu0 %v228
  %248 = vmatpush1.bf16.msra.mxu0 %v227
  %249 = vmatprep.subr.bf16.mxu0 %v230
  %250 = vmatpush1.bf16.msra.mxu0 %v229
  %251 = vmatprep.subr.bf16.mxu0 %v232
  %252 = vmatpush1.bf16.msra.mxu0 %v231
  %253 = vmatprep.subr.bf16.mxu0 0
  %254 = vmatpush1.bf16.msra.mxu0 0
  %255 = vmatprep.subr.bf16.mxu0 0
  %256 = vmatpush1.bf16.msra.mxu0 0
  %257 = vmatprep.subr.bf16.mxu0 0
  %258 = vmatpush1.bf16.msra.mxu0 0
  %259 = vmatprep.subr.bf16.mxu0 0
  %260 = vmatpush1.bf16.msra.mxu0 0
  %261 = vmatprep.subr.bf16.mxu0 0
  %262 = vmatpush1.bf16.msra.mxu0 0
  %263 = vmatprep.subr.bf16.mxu0 0
  %264 = vmatpush1.bf16.msra.mxu0 0
  %265 = vmatprep.subr.bf16.mxu0 0
  %266 = vmatpush1.bf16.msra.mxu0 0
  %267 = vmatprep.subr.bf16.mxu0 0
  %268 = vmatpush1.bf16.msra.mxu0 0
  %269 = vmatprep.subr.bf16.mxu0 0
  %270 = vmatpush1.bf16.msra.mxu0 0
  %271 = vmatprep.subr.bf16.mxu0 0
  %272 = vmatpush1.bf16.msra.mxu0 0
  %273 = vmatprep.subr.bf16.mxu0 0
  %274 = vmatpush1.bf16.msra.mxu0 0
  %275 = vmatprep.subr.bf16.mxu0 0
  %276 = vmatpush1.bf16.msra.mxu0 0
  %277 = vmatprep.mubr.bf16.mxu0 0
  %278 = vmatmul.mubr.bf16.gmra.mrb[0].mxu0 %v243
  %v279 = vpop.f32.mrb[0].mxu0
  %v280 = vadd.f32 0.0, %v279
  %v281 = vpop.f32.mrb[0].mxu0
  %v282 = vadd.f32 0.0, %v281
  %v283 = vpop.f32.mrb[0].mxu0
  %v284 = vpop.f32.mrb[0].mxu0
  %285 = vdwg.mxu0
  %v286 = vadd.f32 %v282, %v34
  %v287 = vtanh.pop %v286
  %v288 = vxor.u32 %v286, 2147483648
  %v289 = vmul.f32 %v288, 1.442695
  %v290 = vpow.pop %v289
  %v291 = vadd.f32 %v290, 1.0
  %v292 = vrcp.pop %v291
  %v293 = vmul.f32 1.0, %v292
  %v294 = vsel %vm169, %v287, %v293
  %v295 = vmul.f32 %v294, 0.0
  %297 = vrot.lane.b32.xlu0 %v294, 64
  %v298 = vpop.permute.xlu0 %297
  %v300 = vmul.f32 %v294, %v298
  %302 = vrot.lane.b32.xlu0 %v300, 32
  %v303 = vpop.permute.xlu0 %302
  %v305 = vadd.f32 %v295, %v303
  %v306 = vtanh.pop %v305
  %308 = vrot.lane.b32.xlu0 %v306, 64
  %v309 = vpop.permute.xlu0 %308
  %v311 = vmul.f32 %v294, %v309
  %v312 = vadd.f32 %v138, %v280
  %v313 = vtanh.pop %v312
  %v314 = vxor.u32 %v312, 2147483648
  %v315 = vmul.f32 %v314, 1.442695
  %v316 = vpow.pop %v315
  %v317 = vadd.f32 %v316, 1.0
  %v318 = vrcp.pop %v317
  %v319 = vmul.f32 1.0, %v318
  %v320 = vsel %vm169, %v313, %v319
  %v321 = vmul.f32 %v320, %v188
  %323 = vrot.lane.b32.xlu0 %v320, 64
  %v324 = vpop.permute.xlu0 %323
  %v326 = vmul.f32 %v320, %v324
  %328 = vrot.lane.b32.xlu0 %v326, 32
  %v329 = vpop.permute.xlu0 %328
  %v331 = vadd.f32 %v321, %v329
  %v332 = vtanh.pop %v331
  %334 = vrot.lane.b32.xlu0 %v332, 64
  %v335 = vpop.permute.xlu0 %334
  %v337 = vmul.f32 %v320, %v335
  %339 = vrot.lane.b32.xlu0 %v337, 32
  %v340 = vpop.permute.xlu0 %339
  %343 = vrot.lane.b32.xlu0 %v311, 64
  %v344 = vpop.permute.xlu0 %343
  %v346 = vsel %vm87, %v340, %v344
  %v347 = vpack.c.bf16 %v346, %v346
  %v349 = vsel %vm241, %v347, 0
  %351 = vmatprep.subr.bf16.mxu0 %v226
  %352 = vmatpush1.bf16.msra.mxu0 %v225
  %353 = vmatprep.subr.bf16.mxu0 %v228
  %354 = vmatpush1.bf16.msra.mxu0 %v227
  %355 = vmatprep.subr.bf16.mxu0 %v230
  %356 = vmatpush1.bf16.msra.mxu0 %v229
  %357 = vmatprep.subr.bf16.mxu0 %v232
  %358 = vmatpush1.bf16.msra.mxu0 %v231
  %359 = vmatprep.subr.bf16.mxu0 0
  %360 = vmatpush1.bf16.msra.mxu0 0
  %361 = vmatprep.subr.bf16.mxu0 0
  %362 = vmatpush1.bf16.msra.mxu0 0
  %363 = vmatprep.subr.bf16.mxu0 0
  %364 = vmatpush1.bf16.msra.mxu0 0
  %365 = vmatprep.subr.bf16.mxu0 0
  %366 = vmatpush1.bf16.msra.mxu0 0
  %367 = vmatprep.subr.bf16.mxu0 0
  %368 = vmatpush1.bf16.msra.mxu0 0
  %369 = vmatprep.subr.bf16.mxu0 0
  %370 = vmatpush1.bf16.msra.mxu0 0
  %371 = vmatprep.subr.bf16.mxu0 0
  %372 = vmatpush1.bf16.msra.mxu0 0
  %373 = vmatprep.subr.bf16.mxu0 0
  %374 = vmatpush1.bf16.msra.mxu0 0
  %375 = vmatprep.subr.bf16.mxu0 0
  %376 = vmatpush1.bf16.msra.mxu0 0
  %377 = vmatprep.subr.bf16.mxu0 0
  %378 = vmatpush1.bf16.msra.mxu0 0
  %379 = vmatprep.subr.bf16.mxu0 0
  %380 = vmatpush1.bf16.msra.mxu0 0
  %381 = vmatprep.subr.bf16.mxu0 0
  %382 = vmatpush1.bf16.msra.mxu0 0
  %383 = vmatprep.mubr.bf16.mxu0 0
  %384 = vmatmul.mubr.bf16.gmra.mrb[0].mxu0 %v349
  %v385 = vpop.f32.mrb[0].mxu0
  %v386 = vadd.f32 0.0, %v385
  %v387 = vpop.f32.mrb[0].mxu0
  %v388 = vadd.f32 0.0, %v387
  %v389 = vpop.f32.mrb[0].mxu0
  %v390 = vpop.f32.mrb[0].mxu0
  %391 = vdwg.mxu0
  %v392 = vadd.f32 %v388, %v34
  %v393 = vtanh.pop %v392
  %v394 = vxor.u32 %v392, 2147483648
  %v395 = vmul.f32 %v394, 1.442695
  %v396 = vpow.pop %v395
  %v397 = vadd.f32 %v396, 1.0
  %v398 = vrcp.pop %v397
  %v399 = vmul.f32 1.0, %v398
  %v400 = vsel %vm169, %v393, %v399
  %v401 = vmul.f32 %v400, %v305
  %403 = vrot.lane.b32.xlu0 %v400, 64
  %v404 = vpop.permute.xlu0 %403
  %v406 = vmul.f32 %v400, %v404
  %408 = vrot.lane.b32.xlu0 %v406, 32
  %v409 = vpop.permute.xlu0 %408
  %v411 = vadd.f32 %v401, %v409
  %v412 = vtanh.pop %v411
  %414 = vrot.lane.b32.xlu0 %v412, 64
  %v415 = vpop.permute.xlu0 %414
  %v417 = vmul.f32 %v400, %v415
  %v418 = vadd.f32 %v143, %v386
  %v419 = vtanh.pop %v418
  %v420 = vxor.u32 %v418, 2147483648
  %v421 = vmul.f32 %v420, 1.442695
  %v422 = vpow.pop %v421
  %v423 = vadd.f32 %v422, 1.0
  %v424 = vrcp.pop %v423
  %v425 = vmul.f32 1.0, %v424
  %v426 = vsel %vm169, %v419, %v425
  %v427 = vmul.f32 %v426, %v331
  %429 = vrot.lane.b32.xlu0 %v426, 64
  %v430 = vpop.permute.xlu0 %429
  %v432 = vmul.f32 %v426, %v430
  %434 = vrot.lane.b32.xlu0 %v432, 32
  %v435 = vpop.permute.xlu0 %434
  %v437 = vadd.f32 %v427, %v435
  %v438 = vtanh.pop %v437
  %440 = vrot.lane.b32.xlu0 %v438, 64
  %v441 = vpop.permute.xlu0 %440
  %v443 = vmul.f32 %v426, %v441
  %445 = vrot.lane.b32.xlu0 %v443, 32
  %v446 = vpop.permute.xlu0 %445
  %449 = vrot.lane.b32.xlu0 %v417, 64
  %v450 = vpop.permute.xlu0 %449
  %v452 = vsel %vm87, %v446, %v450
  %v453 = vpack.c.bf16 %v452, %v452
  %v455 = vsel %vm241, %v453, 0
  %457 = vmatprep.subr.bf16.mxu0 %v226
  %458 = vmatpush1.bf16.msra.mxu0 %v225
  %459 = vmatprep.subr.bf16.mxu0 %v228
  %460 = vmatpush1.bf16.msra.mxu0 %v227
  %461 = vmatprep.subr.bf16.mxu0 %v230
  %462 = vmatpush1.bf16.msra.mxu0 %v229
  %463 = vmatprep.subr.bf16.mxu0 %v232
  %464 = vmatpush1.bf16.msra.mxu0 %v231
  %465 = vmatprep.subr.bf16.mxu0 0
  %466 = vmatpush1.bf16.msra.mxu0 0
  %467 = vmatprep.subr.bf16.mxu0 0
  %468 = vmatpush1.bf16.msra.mxu0 0
  %469 = vmatprep.subr.bf16.mxu0 0
  %470 = vmatpush1.bf16.msra.mxu0 0
  %471 = vmatprep.subr.bf16.mxu0 0
  %472 = vmatpush1.bf16.msra.mxu0 0
  %473 = vmatprep.subr.bf16.mxu0 0
  %474 = vmatpush1.bf16.msra.mxu0 0
  %475 = vmatprep.subr.bf16.mxu0 0
  %476 = vmatpush1.bf16.msra.mxu0 0
  %477 = vmatprep.subr.bf16.mxu0 0
  %478 = vmatpush1.bf16.msra.mxu0 0
  %479 = vmatprep.subr.bf16.mxu0 0
  %480 = vmatpush1.bf16.msra.mxu0 0
  %481 = vmatprep.subr.bf16.mxu0 0
  %482 = vmatpush1.bf16.msra.mxu0 0
  %483 = vmatprep.subr.bf16.mxu0 0
  %484 = vmatpush1.bf16.msra.mxu0 0
  %485 = vmatprep.subr.bf16.mxu0 0
  %486 = vmatpush1.bf16.msra.mxu0 0
  %487 = vmatprep.subr.bf16.mxu0 0
  %488 = vmatpush1.bf16.msra.mxu0 0
  %489 = vmatprep.mubr.bf16.mxu0 0
  %490 = vmatmul.mubr.bf16.gmra.mrb[0].mxu0 %v455
  %v491 = vpop.f32.mrb[0].mxu0
  %v492 = vadd.f32 0.0, %v491
  %v493 = vpop.f32.mrb[0].mxu0
  %v494 = vadd.f32 0.0, %v493
  %v495 = vpop.f32.mrb[0].mxu0
  %v496 = vpop.f32.mrb[0].mxu0
  %497 = vdwg.mxu0
  %v498 = vadd.f32 %v494, %v34
  %v499 = vtanh.pop %v498
  %v500 = vxor.u32 %v498, 2147483648
  %v501 = vmul.f32 %v500, 1.442695
  %v502 = vpow.pop %v501
  %v503 = vadd.f32 %v502, 1.0
  %v504 = vrcp.pop %v503
  %v505 = vmul.f32 1.0, %v504
  %v506 = vsel %vm169, %v499, %v505
  %v507 = vmul.f32 %v506, %v411
  %509 = vrot.lane.b32.xlu0 %v506, 64
  %v510 = vpop.permute.xlu0 %509
  %v512 = vmul.f32 %v506, %v510
  %514 = vrot.lane.b32.xlu0 %v512, 32
  %v515 = vpop.permute.xlu0 %514
  %v517 = vadd.f32 %v507, %v515
  %v518 = vtanh.pop %v517
  %520 = vrot.lane.b32.xlu0 %v518, 64
  %v521 = vpop.permute.xlu0 %520
  %v523 = vmul.f32 %v506, %v521
  %v524 = vadd.f32 %v146, %v492
  %v525 = vtanh.pop %v524
  %v526 = vxor.u32 %v524, 2147483648
  %v527 = vmul.f32 %v526, 1.442695
  %v528 = vpow.pop %v527
  %v529 = vadd.f32 %v528, 1.0
  %v530 = vrcp.pop %v529
  %v531 = vmul.f32 1.0, %v530
  %v532 = vsel %vm169, %v525, %v531
  %v533 = vmul.f32 %v532, %v437
  %535 = vrot.lane.b32.xlu0 %v532, 64
  %v536 = vpop.permute.xlu0 %535
  %v538 = vmul.f32 %v532, %v536
  %540 = vrot.lane.b32.xlu0 %v538, 32
  %v541 = vpop.permute.xlu0 %540
  %v543 = vadd.f32 %v533, %v541
  %v544 = vtanh.pop %v543
  %546 = vrot.lane.b32.xlu0 %v544, 64
  %v547 = vpop.permute.xlu0 %546
  %v549 = vmul.f32 %v532, %v547
  %551 = vrot.lane.b32.xlu0 %v549, 32
  %v552 = vpop.permute.xlu0 %551
  %555 = vrot.lane.b32.xlu0 %v523, 64
  %v556 = vpop.permute.xlu0 %555
  %v558 = vsel %vm87, %v552, %v556
  %v559 = vpack.c.bf16 %v558, %v558
  %v561 = vsel %vm241, %v559, 0
  %563 = vmatprep.subr.bf16.mxu0 %v226
  %564 = vmatpush1.bf16.msra.mxu0 %v225
  %565 = vmatprep.subr.bf16.mxu0 %v228
  %566 = vmatpush1.bf16.msra.mxu0 %v227
  %567 = vmatprep.subr.bf16.mxu0 %v230
  %568 = vmatpush1.bf16.msra.mxu0 %v229
  %569 = vmatprep.subr.bf16.mxu0 %v232
  %570 = vmatpush1.bf16.msra.mxu0 %v231
  %571 = vmatprep.subr.bf16.mxu0 0
  %572 = vmatpush1.bf16.msra.mxu0 0
  %573 = vmatprep.subr.bf16.mxu0 0
  %574 = vmatpush1.bf16.msra.mxu0 0
  %575 = vmatprep.subr.bf16.mxu0 0
  %576 = vmatpush1.bf16.msra.mxu0 0
  %577 = vmatprep.subr.bf16.mxu0 0
  %578 = vmatpush1.bf16.msra.mxu0 0
  %579 = vmatprep.subr.bf16.mxu0 0
  %580 = vmatpush1.bf16.msra.mxu0 0
  %581 = vmatprep.subr.bf16.mxu0 0
  %582 = vmatpush1.bf16.msra.mxu0 0
  %583 = vmatprep.subr.bf16.mxu0 0
  %584 = vmatpush1.bf16.msra.mxu0 0
  %585 = vmatprep.subr.bf16.mxu0 0
  %586 = vmatpush1.bf16.msra.mxu0 0
  %587 = vmatprep.subr.bf16.mxu0 0
  %588 = vmatpush1.bf16.msra.mxu0 0
  %589 = vmatprep.subr.bf16.mxu0 0
  %590 = vmatpush1.bf16.msra.mxu0 0
  %591 = vmatprep.subr.bf16.mxu0 0
  %592 = vmatpush1.bf16.msra.mxu0 0
  %593 = vmatprep.subr.bf16.mxu0 0
  %594 = vmatpush1.bf16.msra.mxu0 0
  %595 = vmatprep.mubr.bf16.mxu0 0
  %596 = vmatmul.mubr.bf16.gmra.mrb[0].mxu0 %v561
  %v597 = vpop.f32.mrb[0].mxu0
  %v598 = vadd.f32 0.0, %v597
  %v599 = vpop.f32.mrb[0].mxu0
  %v600 = vadd.f32 0.0, %v599
  %v601 = vpop.f32.mrb[0].mxu0
  %v602 = vpop.f32.mrb[0].mxu0
  %603 = vdwg.mxu0
  %v604 = vadd.f32 %v600, %v34
  %v605 = vtanh.pop %v604
  %v606 = vxor.u32 %v604, 2147483648
  %v607 = vmul.f32 %v606, 1.442695
  %v608 = vpow.pop %v607
  %v609 = vadd.f32 %v608, 1.0
  %v610 = vrcp.pop %v609
  %v611 = vmul.f32 1.0, %v610
  %v612 = vsel %vm169, %v605, %v611
  %v613 = vmul.f32 %v612, %v517
  %615 = vrot.lane.b32.xlu0 %v612, 64
  %v616 = vpop.permute.xlu0 %615
  %v618 = vmul.f32 %v612, %v616
  %620 = vrot.lane.b32.xlu0 %v618, 32
  %v621 = vpop.permute.xlu0 %620
  %v623 = vadd.f32 %v613, %v621
  %v624 = vtanh.pop %v623
  %626 = vrot.lane.b32.xlu0 %v624, 64
  %v627 = vpop.permute.xlu0 %626
  %v629 = vmul.f32 %v612, %v627
  %v630 = vadd.f32 %v151, %v598
  %v631 = vtanh.pop %v630
  %v632 = vxor.u32 %v630, 2147483648
  %v633 = vmul.f32 %v632, 1.442695
  %v634 = vpow.pop %v633
  %v635 = vadd.f32 %v634, 1.0
  %v636 = vrcp.pop %v635
  %v637 = vmul.f32 1.0, %v636
  %v638 = vsel %vm169, %v631, %v637
  %v639 = vmul.f32 %v638, %v543
  %641 = vrot.lane.b32.xlu0 %v638, 64
  %v642 = vpop.permute.xlu0 %641
  %v644 = vmul.f32 %v638, %v642
  %646 = vrot.lane.b32.xlu0 %v644, 32
  %v647 = vpop.permute.xlu0 %646
  %v649 = vadd.f32 %v639, %v647
  %v650 = vtanh.pop %v649
  %652 = vrot.lane.b32.xlu0 %v650, 64
  %v653 = vpop.permute.xlu0 %652
  %v655 = vmul.f32 %v638, %v653
  %657 = vrot.lane.b32.xlu0 %v655, 32
  %v658 = vpop.permute.xlu0 %657
  %661 = vrot.lane.b32.xlu0 %v629, 64
  %v662 = vpop.permute.xlu0 %661
  %v664 = vsel %vm87, %v658, %v662
  %v665 = vpack.c.bf16 %v664, %v664
  %v667 = vsel %vm241, %v665, 0
  %669 = vmatprep.subr.bf16.mxu0 %v226
  %670 = vmatpush1.bf16.msra.mxu0 %v225
  %671 = vmatprep.subr.bf16.mxu0 %v228
  %672 = vmatpush1.bf16.msra.mxu0 %v227
  %673 = vmatprep.subr.bf16.mxu0 %v230
  %674 = vmatpush1.bf16.msra.mxu0 %v229
  %675 = vmatprep.subr.bf16.mxu0 %v232
  %676 = vmatpush1.bf16.msra.mxu0 %v231
  %677 = vmatprep.subr.bf16.mxu0 0
  %678 = vmatpush1.bf16.msra.mxu0 0
  %679 = vmatprep.subr.bf16.mxu0 0
  %680 = vmatpush1.bf16.msra.mxu0 0
  %681 = vmatprep.subr.bf16.mxu0 0
  %682 = vmatpush1.bf16.msra.mxu0 0
  %683 = vmatprep.subr.bf16.mxu0 0
  %684 = vmatpush1.bf16.msra.mxu0 0
  %685 = vmatprep.subr.bf16.mxu0 0
  %686 = vmatpush1.bf16.msra.mxu0 0
  %687 = vmatprep.subr.bf16.mxu0 0
  %688 = vmatpush1.bf16.msra.mxu0 0
  %689 = vmatprep.subr.bf16.mxu0 0
  %690 = vmatpush1.bf16.msra.mxu0 0
  %691 = vmatprep.subr.bf16.mxu0 0
  %692 = vmatpush1.bf16.msra.mxu0 0
  %693 = vmatprep.subr.bf16.mxu0 0
  %694 = vmatpush1.bf16.msra.mxu0 0
  %695 = vmatprep.subr.bf16.mxu0 0
  %696 = vmatpush1.bf16.msra.mxu0 0
  %697 = vmatprep.subr.bf16.mxu0 0
  %698 = vmatpush1.bf16.msra.mxu0 0
  %699 = vmatprep.subr.bf16.mxu0 0
  %700 = vmatpush1.bf16.msra.mxu0 0
  %701 = vmatprep.mubr.bf16.mxu0 0
  %702 = vmatmul.mubr.bf16.gmra.mrb[0].mxu0 %v667
  %v703 = vpop.f32.mrb[0].mxu0
  %v704 = vadd.f32 0.0, %v703
  %v705 = vpop.f32.mrb[0].mxu0
  %v706 = vadd.f32 0.0, %v705
  %v707 = vpop.f32.mrb[0].mxu0
  %v708 = vpop.f32.mrb[0].mxu0
  %709 = vdwg.mxu0
  %v710 = vadd.f32 %v706, %v34
  %v711 = vtanh.pop %v710
  %v712 = vxor.u32 %v710, 2147483648
  %v713 = vmul.f32 %v712, 1.442695
  %v714 = vpow.pop %v713
  %v715 = vadd.f32 %v714, 1.0
  %v716 = vrcp.pop %v715
  %v717 = vmul.f32 1.0, %v716
  %v718 = vsel %vm169, %v711, %v717
  %v719 = vmul.f32 %v718, %v623
  %721 = vrot.lane.b32.xlu0 %v718, 64
  %v722 = vpop.permute.xlu0 %721
  %v724 = vmul.f32 %v718, %v722
  %726 = vrot.lane.b32.xlu0 %v724, 32
  %v727 = vpop.permute.xlu0 %726
  %v729 = vadd.f32 %v719, %v727
  %v730 = vtanh.pop %v729
  %732 = vrot.lane.b32.xlu0 %v730, 64
  %v733 = vpop.permute.xlu0 %732
  %v735 = vmul.f32 %v718, %v733
  %v736 = vadd.f32 %v154, %v704
  %v737 = vtanh.pop %v736
  %v738 = vxor.u32 %v736, 2147483648
  %v739 = vmul.f32 %v738, 1.442695
  %v740 = vpow.pop %v739
  %v741 = vadd.f32 %v740, 1.0
  %v742 = vrcp.pop %v741
  %v743 = vmul.f32 1.0, %v742
  %v744 = vsel %vm169, %v737, %v743
  %v745 = vmul.f32 %v744, %v649
  %747 = vrot.lane.b32.xlu0 %v744, 64
  %v748 = vpop.permute.xlu0 %747
  %v750 = vmul.f32 %v744, %v748
  %752 = vrot.lane.b32.xlu0 %v750, 32
  %v753 = vpop.permute.xlu0 %752
  %v755 = vadd.f32 %v745, %v753
  %v756 = vtanh.pop %v755
  %758 = vrot.lane.b32.xlu0 %v756, 64
  %v759 = vpop.permute.xlu0 %758
  %v761 = vmul.f32 %v744, %v759
  %763 = vrot.lane.b32.xlu0 %v761, 32
  %v764 = vpop.permute.xlu0 %763
  %767 = vrot.lane.b32.xlu0 %v735, 64
  %v768 = vpop.permute.xlu0 %767
  %v770 = vsel %vm87, %v764, %v768
  %v771 = vpack.c.bf16 %v770, %v770
  %v773 = vsel %vm241, %v771, 0
  %775 = vmatprep.subr.bf16.mxu0 %v226
  %776 = vmatpush1.bf16.msra.mxu0 %v225
  %777 = vmatprep.subr.bf16.mxu0 %v228
  %778 = vmatpush1.bf16.msra.mxu0 %v227
  %779 = vmatprep.subr.bf16.mxu0 %v230
  %780 = vmatpush1.bf16.msra.mxu0 %v229
  %781 = vmatprep.subr.bf16.mxu0 %v232
  %782 = vmatpush1.bf16.msra.mxu0 %v231
  %783 = vmatprep.subr.bf16.mxu0 0
  %784 = vmatpush1.bf16.msra.mxu0 0
  %785 = vmatprep.subr.bf16.mxu0 0
  %786 = vmatpush1.bf16.msra.mxu0 0
  %787 = vmatprep.subr.bf16.mxu0 0
  %788 = vmatpush1.bf16.msra.mxu0 0
  %789 = vmatprep.subr.bf16.mxu0 0
  %790 = vmatpush1.bf16.msra.mxu0 0
  %791 = vmatprep.subr.bf16.mxu0 0
  %792 = vmatpush1.bf16.msra.mxu0 0
  %793 = vmatprep.subr.bf16.mxu0 0
  %794 = vmatpush1.bf16.msra.mxu0 0
  %795 = vmatprep.subr.bf16.mxu0 0
  %796 = vmatpush1.bf16.msra.mxu0 0
  %797 = vmatprep.subr.bf16.mxu0 0
  %798 = vmatpush1.bf16.msra.mxu0 0
  %799 = vmatprep.subr.bf16.mxu0 0
  %800 = vmatpush1.bf16.msra.mxu0 0
  %801 = vmatprep.subr.bf16.mxu0 0
  %802 = vmatpush1.bf16.msra.mxu0 0
  %803 = vmatprep.subr.bf16.mxu0 0
  %804 = vmatpush1.bf16.msra.mxu0 0
  %805 = vmatprep.subr.bf16.mxu0 0
  %806 = vmatpush1.bf16.msra.mxu0 0
  %807 = vmatprep.mubr.bf16.mxu0 0
  %808 = vmatmul.mubr.bf16.gmra.mrb[0].mxu0 %v773
  %v809 = vpop.f32.mrb[0].mxu0
  %v810 = vadd.f32 0.0, %v809
  %v811 = vpop.f32.mrb[0].mxu0
  %v812 = vadd.f32 0.0, %v811
  %v813 = vpop.f32.mrb[0].mxu0
  %v814 = vpop.f32.mrb[0].mxu0
  %815 = vdwg.mxu0
  %v816 = vadd.f32 %v812, %v34
  %v817 = vtanh.pop %v816
  %v818 = vxor.u32 %v816, 2147483648
  %v819 = vmul.f32 %v818, 1.442695
  %v820 = vpow.pop %v819
  %v821 = vadd.f32 %v820, 1.0
  %v822 = vrcp.pop %v821
  %v823 = vmul.f32 1.0, %v822
  %v824 = vsel %vm169, %v817, %v823
  %v825 = vmul.f32 %v824, %v729
  %827 = vrot.lane.b32.xlu0 %v824, 64
  %v828 = vpop.permute.xlu0 %827
  %v830 = vmul.f32 %v824, %v828
  %832 = vrot.lane.b32.xlu0 %v830, 32
  %v833 = vpop.permute.xlu0 %832
  %v835 = vadd.f32 %v825, %v833
  %v836 = vtanh.pop %v835
  %838 = vrot.lane.b32.xlu0 %v836, 64
  %v839 = vpop.permute.xlu0 %838
  %v841 = vmul.f32 %v824, %v839
  %v842 = vadd.f32 %v159, %v810
  %v843 = vtanh.pop %v842
  %v844 = vxor.u32 %v842, 2147483648
  %v845 = vmul.f32 %v844, 1.442695
  %v846 = vpow.pop %v845
  %v847 = vadd.f32 %v846, 1.0
  %v848 = vrcp.pop %v847
  %v849 = vmul.f32 1.0, %v848
  %v850 = vsel %vm169, %v843, %v849
  %v851 = vmul.f32 %v850, %v755
  %853 = vrot.lane.b32.xlu0 %v850, 64
  %v854 = vpop.permute.xlu0 %853
  %v856 = vmul.f32 %v850, %v854
  %858 = vrot.lane.b32.xlu0 %v856, 32
  %v859 = vpop.permute.xlu0 %858
  %v861 = vadd.f32 %v851, %v859
  %v862 = vtanh.pop %v861
  %864 = vrot.lane.b32.xlu0 %v862, 64
  %v865 = vpop.permute.xlu0 %864
  %v867 = vmul.f32 %v850, %v865
  %869 = vrot.lane.b32.xlu0 %v867, 32
  %v870 = vpop.permute.xlu0 %869
  %873 = vrot.lane.b32.xlu0 %v841, 64
  %v874 = vpop.permute.xlu0 %873
  %v876 = vsel %vm87, %v870, %v874
  %v877 = vpack.c.bf16 %v876, %v876
  %v879 = vsel %vm241, %v877, 0
  %881 = vmatprep.subr.bf16.mxu0 %v226
  %882 = vmatpush1.bf16.msra.mxu0 %v225
  %883 = vmatprep.subr.bf16.mxu0 %v228
  %884 = vmatpush1.bf16.msra.mxu0 %v227
  %885 = vmatprep.subr.bf16.mxu0 %v230
  %886 = vmatpush1.bf16.msra.mxu0 %v229
  %887 = vmatprep.subr.bf16.mxu0 %v232
  %888 = vmatpush1.bf16.msra.mxu0 %v231
  %889 = vmatprep.subr.bf16.mxu0 0
  %890 = vmatpush1.bf16.msra.mxu0 0
  %891 = vmatprep.subr.bf16.mxu0 0
  %892 = vmatpush1.bf16.msra.mxu0 0
  %893 = vmatprep.subr.bf16.mxu0 0
  %894 = vmatpush1.bf16.msra.mxu0 0
  %895 = vmatprep.subr.bf16.mxu0 0
  %896 = vmatpush1.bf16.msra.mxu0 0
  %897 = vmatprep.subr.bf16.mxu0 0
  %898 = vmatpush1.bf16.msra.mxu0 0
  %899 = vmatprep.subr.bf16.mxu0 0
  %900 = vmatpush1.bf16.msra.mxu0 0
  %901 = vmatprep.subr.bf16.mxu0 0
  %902 = vmatpush1.bf16.msra.mxu0 0
  %903 = vmatprep.subr.bf16.mxu0 0
  %904 = vmatpush1.bf16.msra.mxu0 0
  %905 = vmatprep.subr.bf16.mxu0 0
  %906 = vmatpush1.bf16.msra.mxu0 0
  %907 = vmatprep.subr.bf16.mxu0 0
  %908 = vmatpush1.bf16.msra.mxu0 0
  %909 = vmatprep.subr.bf16.mxu0 0
  %910 = vmatpush1.bf16.msra.mxu0 0
  %911 = vmatprep.subr.bf16.mxu0 0
  %912 = vmatpush1.bf16.msra.mxu0 0
  %913 = vmatprep.mubr.bf16.mxu0 0
  %914 = vmatmul.mubr.bf16.gmra.mrb[0].mxu0 %v879
  %v915 = vpop.f32.mrb[0].mxu0
  %v916 = vadd.f32 0.0, %v915
  %v917 = vpop.f32.mrb[0].mxu0
  %v918 = vadd.f32 0.0, %v917
  %v919 = vpop.f32.mrb[0].mxu0
  %v920 = vpop.f32.mrb[0].mxu0
  %921 = vdwg.mxu0
  %v922 = vadd.f32 %v918, %v34
  %v923 = vtanh.pop %v922
  %v924 = vxor.u32 %v922, 2147483648
  %v925 = vmul.f32 %v924, 1.442695
  %v926 = vpow.pop %v925
  %v927 = vadd.f32 %v926, 1.0
  %v928 = vrcp.pop %v927
  %v929 = vmul.f32 1.0, %v928
  %v930 = vsel %vm169, %v923, %v929
  %v931 = vmul.f32 %v930, %v835
  %933 = vrot.lane.b32.xlu0 %v930, 64
  %v934 = vpop.permute.xlu0 %933
  %v936 = vmul.f32 %v930, %v934
  %938 = vrot.lane.b32.xlu0 %v936, 32
  %v939 = vpop.permute.xlu0 %938
  %v941 = vadd.f32 %v931, %v939
  %v942 = vtanh.pop %v941
  %944 = vrot.lane.b32.xlu0 %v942, 64
  %v945 = vpop.permute.xlu0 %944
  %v947 = vmul.f32 %v930, %v945
  %v948 = vadd.f32 %v162, %v916
  %v949 = vtanh.pop %v948
  %v950 = vxor.u32 %v948, 2147483648
  %v951 = vmul.f32 %v950, 1.442695
  %v952 = vpow.pop %v951
  %v953 = vadd.f32 %v952, 1.0
  %v954 = vrcp.pop %v953
  %v955 = vmul.f32 1.0, %v954
  %v956 = vsel %vm169, %v949, %v955
  %v957 = vmul.f32 %v956, %v861
  %959 = vrot.lane.b32.xlu0 %v956, 64
  %v960 = vpop.permute.xlu0 %959
  %v962 = vmul.f32 %v956, %v960
  %964 = vrot.lane.b32.xlu0 %v962, 32
  %v965 = vpop.permute.xlu0 %964
  %v967 = vadd.f32 %v957, %v965
  %v968 = vtanh.pop %v967
  %970 = vrot.lane.b32.xlu0 %v968, 64
  %v971 = vpop.permute.xlu0 %970
  %v973 = vmul.f32 %v956, %v971
  %975 = vrot.lane.b32.xlu0 %v973, 32
  %v976 = vpop.permute.xlu0 %975
  %979 = vrot.lane.b32.xlu0 %v947, 64
  %v980 = vpop.permute.xlu0 %979
  %v982 = vsel %vm87, %v976, %v980
  %v983 = vpack.c.bf16 %v982, %v982
  %v985 = vsel %vm241, %v983, 0
  %987 = vmatprep.subr.bf16.mxu0 %v226
  %988 = vmatpush1.bf16.msra.mxu0 %v225
  %989 = vmatprep.subr.bf16.mxu0 %v228
  %990 = vmatpush1.bf16.msra.mxu0 %v227
  %991 = vmatprep.subr.bf16.mxu0 %v230
  %992 = vmatpush1.bf16.msra.mxu0 %v229
  %993 = vmatprep.subr.bf16.mxu0 %v232
  %994 = vmatpush1.bf16.msra.mxu0 %v231
  %995 = vmatprep.subr.bf16.mxu0 0
  %996 = vmatpush1.bf16.msra.mxu0 0
  %997 = vmatprep.subr.bf16.mxu0 0
  %998 = vmatpush1.bf16.msra.mxu0 0
  %999 = vmatprep.subr.bf16.mxu0 0
  %1000 = vmatpush1.bf16.msra.mxu0 0
  %1001 = vmatprep.subr.bf16.mxu0 0
  %1002 = vmatpush1.bf16.msra.mxu0 0
  %1003 = vmatprep.subr.bf16.mxu0 0
  %1004 = vmatpush1.bf16.msra.mxu0 0
  %1005 = vmatprep.subr.bf16.mxu0 0
  %1006 = vmatpush1.bf16.msra.mxu0 0
  %1007 = vmatprep.subr.bf16.mxu0 0
  %1008 = vmatpush1.bf16.msra.mxu0 0
  %1009 = vmatprep.subr.bf16.mxu0 0
  %1010 = vmatpush1.bf16.msra.mxu0 0
  %1011 = vmatprep.subr.bf16.mxu0 0
  %1012 = vmatpush1.bf16.msra.mxu0 0
  %1013 = vmatprep.subr.bf16.mxu0 0
  %1014 = vmatpush1.bf16.msra.mxu0 0
  %1015 = vmatprep.subr.bf16.mxu0 0
  %1016 = vmatpush1.bf16.msra.mxu0 0
  %1017 = vmatprep.subr.bf16.mxu0 0
  %1018 = vmatpush1.bf16.msra.mxu0 0
  %1019 = vmatprep.mubr.bf16.mxu0 0
  %1020 = vmatmul.mubr.bf16.gmra.mrb[0].mxu0 %v985
  %v1021 = vpop.f32.mrb[0].mxu0
  %v1022 = vpop.f32.mrb[0].mxu0
  %v1023 = vadd.f32 0.0, %v1022
  %v1024 = vpop.f32.mrb[0].mxu0
  %v1025 = vpop.f32.mrb[0].mxu0
  %1026 = vdwg.mxu0
  %v1027 = vadd.f32 %v1023, %v34
  %v1028 = vtanh.pop %v1027
  %v1029 = vxor.u32 %v1027, 2147483648
  %v1030 = vmul.f32 %v1029, 1.442695
  %v1031 = vpow.pop %v1030
  %v1032 = vadd.f32 %v1031, 1.0
  %v1033 = vrcp.pop %v1032
  %v1034 = vmul.f32 1.0, %v1033
  %v1035 = vsel %vm169, %v1028, %v1034
  %v1036 = vmul.f32 %v1035, %v941
  %1038 = vrot.lane.b32.xlu0 %v1035, 64
  %v1039 = vpop.permute.xlu0 %1038
  %v1041 = vmul.f32 %v1035, %v1039
  %1043 = vrot.lane.b32.xlu0 %v1041, 32
  %v1044 = vpop.permute.xlu0 %1043
  %v1046 = vadd.f32 %v1036, %v1044
  %v1047 = vtanh.pop %v1046
  %1049 = vrot.lane.b32.xlu0 %v1047, 64
  %v1050 = vpop.permute.xlu0 %1049
  %v1052 = vmul.f32 %v1035, %v1050
  %1054 = vrot.lane.b32.xlu0 %v1052, 32
  %v1055 = vpop.permute.xlu0 %1054
  %1057 = vst.msk [vmem:[%s5] sm:$0xff] %vm87, %v1055
  // Predicated region
  $region22: #{rnn_forward.1} parent=0 // pred_check
    _
  $region23: #{rnn_forward.1} parent=0 // pred_check_branch
    %1059 = sbr.rel (0) target = $region25
  $region24: #{rnn_forward.1} parent=0 // pred_region
    _
  $region25: #{rnn_forward.1} parent=0 // pred_fallthru
    _
  // Predicated region
  $region26: #{rnn_forward.1} parent=0 // pred_check
    _
  $region27: #{rnn_forward.1} parent=0 // pred_check_branch
    %1061 = sbr.rel (0) target = $region29
  $region28: #{rnn_forward.1} parent=0 // pred_region
    _
  $region29: #{rnn_forward.1} parent=0 // pred_fallthru
    _

</llo_original>
